<compile_context>
chip_gen: v7x
topology: tpu7x:2x2x1
jax: 0.10.0
libtpu: 0.0.40
codegen_flags: <defaults>
</compile_context>

<pallas_src>
import functools

import jax
import jax.numpy as jnp
from jax import lax
from jax.experimental import pallas as pl
from jax.experimental.pallas import tpu as pltpu


def _round_up(x, m):
    return (x + m - 1) // m * m


# ---------------------------------------------------------------------------
# Fused Pallas kernel: the WHOLE residual stack in one pallas_call.
# ---------------------------------------------------------------------------
def _residual_stack_kernel(dil_ref,                              # scalar prefetch (SMEM)
                           x_ref, wg_ref, bg_ref, wo_ref, bo_ref,  # inputs
                           skip_ref,                             # output (accumulator)
                           x_vmem,                               # VMEM scratch (residual state)
                           *, T, TB, Cp, Csp, distinct_dils, compute_dtype):
    nb = pl.program_id(1)                     # block index (sequential / "arbitrary")
    M = TB * T

    @pl.when(nb == 0)
    def _init():
        x_vmem[...] = x_ref[...]              # load this batch tile's input
        skip_ref[...] = jnp.zeros_like(skip_ref)

    x = x_vmem[...]                           # (M, Cp) f32 residual state
    d_val = dil_ref[nb]                       # this block's dilation (SMEM scalar)

    # Dilated left-zero-pad shift: x_shift[b, t] = x[b, t - d]  (0 for t < d).
    # The dilation varies per grid step but comes from a small static set, so
    # select among statically-shifted rolls (XLU) with a cheap (M, 1) mask.
    rowt = lax.broadcasted_iota(jnp.int32, (M, 1), 0) % T       # time-within-batch
    x_shift = jnp.zeros_like(x)
    for d in distinct_dils:                   # static unroll over distinct dilations
        rolled = pltpu.roll(x, shift=d, axis=0)
        sel = jnp.logical_and(d_val == d, rowt >= d)
        x_shift = jnp.where(sel, rolled, x_shift)

    # Both dilated gate convs (tanh & sigmoid, both taps) as ONE matmul:
    #   [x | x_shift] @ [[wt1 ws1], [wt0 ws0]]  ->  [t_pre | s_pre]
    xcat = jnp.concatenate([x, x_shift], axis=-1).astype(compute_dtype)   # (M, 2Cp)
    pre = (jnp.dot(xcat, wg_ref[0], preferred_element_type=jnp.float32)
           + bg_ref[0])                                                    # (M, 2Cp) f32
    g = jnp.tanh(pre[:, :Cp]) * jax.nn.sigmoid(pre[:, Cp:])                # (M, Cp) f32

    # 1x1 residual conv and 1x1 skip conv as ONE matmul:  g @ [wr | wk].
    out = (jnp.dot(g.astype(compute_dtype), wo_ref[0],
                   preferred_element_type=jnp.float32)
           + bo_ref[0])                                                    # (M, Cp+Csp) f32

    # Residual connection (f32 state kept in VMEM for the next block).
    x_vmem[...] = x + out[:, :Cp]

    # Skip path: per-batch-element mean over time, accumulated across blocks.
    skip_b = jnp.sum(out[:, Cp:].reshape(TB, T, Csp), axis=1)              # (TB, Csp)
    skip_ref[...] += skip_b * (1.0 / T)


# ---------------------------------------------------------------------------
# Wrapper: weight fusion / padding + the single pallas_call.
# ---------------------------------------------------------------------------
def _fuse_block_params(p, Cp, Csp):
    def pad_to(a, rows, cols):
        return jnp.pad(a, ((0, rows - a.shape[0]), (0, cols - a.shape[1])))
    w_gate = jnp.block([[pad_to(p["wt1"], Cp, Cp), pad_to(p["ws1"], Cp, Cp)],
                        [pad_to(p["wt0"], Cp, Cp), pad_to(p["ws0"], Cp, Cp)]])   # (2Cp, 2Cp)
    b_gate = jnp.concatenate([pad_to(p["bt"], 1, Cp),
                              pad_to(p["bs"], 1, Cp)], axis=1)                   # (1, 2Cp)
    w_out = jnp.concatenate([pad_to(p["wr"], Cp, Cp),
                             pad_to(p["wk"], Cp, Csp)], axis=1)                  # (Cp, Cp+Csp)
    b_out = jnp.concatenate([pad_to(p["br"], 1, Cp),
                             pad_to(p["bk"], 1, Csp)], axis=1)                   # (1, Cp+Csp)
    return w_gate, b_gate, w_out, b_out


def residual_stack_forward(x_ncw, block_params, dilations, *,
                           batch_tile=None, compute_dtype=jnp.bfloat16):
    """ResidualStack forward.  x_ncw: (B, residual_dim, T) -> (B, skip_dim, 1)."""
    B, Cr, T = x_ncw.shape
    Cs = block_params[0]["wk"].shape[1]
    NB = len(dilations)
    assert NB == len(block_params)

    Cp, Csp = _round_up(Cr, 128), _round_up(Cs, 128)   # lane-dense channel padding

    TB = B if batch_tile is None else batch_tile       # batch elements per grid step
    assert B % TB == 0
    assert TB == B or TB % 8 == 0                      # keep (TB, Csp) output block legal
    M = TB * T
    assert M % 8 == 0

    # NCW -> (B*T, Cp): time on sublanes, channels (zero-padded) on lanes.
    x_btc = jnp.transpose(x_ncw, (0, 2, 1)).astype(jnp.float32)
    x_flat = jnp.pad(x_btc, ((0, 0), (0, 0), (0, Cp - Cr))).reshape(B * T, Cp)

    fused = [_fuse_block_params(p, Cp, Csp) for p in block_params]
    wg_all = jnp.stack([f[0] for f in fused]).astype(compute_dtype)   # (NB, 2Cp, 2Cp)
    bg_all = jnp.stack([f[1] for f in fused]).astype(jnp.float32)     # (NB, 1, 2Cp)
    wo_all = jnp.stack([f[2] for f in fused]).astype(compute_dtype)   # (NB, Cp, Cp+Csp)
    bo_all = jnp.stack([f[3] for f in fused]).astype(jnp.float32)     # (NB, 1, Cp+Csp)

    dil = jnp.asarray(list(dilations), jnp.int32)                     # scalar prefetch
    distinct_dils = tuple(sorted({int(d) for d in dilations}))

    kernel = functools.partial(
        _residual_stack_kernel, T=T, TB=TB, Cp=Cp, Csp=Csp,
        distinct_dils=distinct_dils, compute_dtype=compute_dtype)

    skip = pl.pallas_call(
        kernel,
        out_shape=jax.ShapeDtypeStruct((B, Csp), jnp.float32),
        grid_spec=pltpu.PrefetchScalarGridSpec(
            num_scalar_prefetch=1,
            grid=(B // TB, NB),
            in_specs=[
                # activation tile: constant in nb -> fetched once per batch tile
                pl.BlockSpec((M, Cp), lambda b, nb, dil: (b, 0)),
                # per-block fused weights: streamed along the block axis
                pl.BlockSpec((1, 2 * Cp, 2 * Cp), lambda b, nb, dil: (nb, 0, 0)),
                pl.BlockSpec((1, 1, 2 * Cp), lambda b, nb, dil: (nb, 0, 0)),
                pl.BlockSpec((1, Cp, Cp + Csp), lambda b, nb, dil: (nb, 0, 0)),
                pl.BlockSpec((1, 1, Cp + Csp), lambda b, nb, dil: (nb, 0, 0)),
            ],
            # skip-sum accumulator: constant in nb -> VMEM-resident across blocks
            out_specs=pl.BlockSpec((TB, Csp), lambda b, nb, dil: (b, 0)),
            scratch_shapes=[pltpu.VMEM((M, Cp), jnp.float32)],
        ),
        compiler_params=pltpu.CompilerParams(
            dimension_semantics=("parallel", "arbitrary"),
            vmem_limit_bytes=32 * 1024 * 1024),
    )(dil, x_flat, wg_all, bg_all, wo_all, bo_all)

    return skip[:, :Cs].reshape(B, Cs, 1)   # PyTorch-shaped (B, skip_dim, 1)


# ---------------------------------------------------------------------------
# Pure-JAX reference (same parameterization).  matmul_dtype=bf16 mirrors the
# kernel's bf16 matmul inputs (f32 accumulation), for a tight check.
# ---------------------------------------------------------------------------
def _stack_ref(x_ncw, block_params, dilations, matmul_dtype=jnp.float32):
    def cast(a):
        return a.astype(matmul_dtype).astype(jnp.float32)
    x = jnp.transpose(x_ncw, (0, 2, 1)).astype(jnp.float32)   # (B, T, Cr)
    T = x.shape[1]
    skip_sum = None
    for p, d in zip(block_params, dilations):
        x_shift = jnp.pad(x, ((0, 0), (d, 0), (0, 0)))[:, :T, :]
        t_pre = cast(x) @ cast(p["wt1"]) + cast(x_shift) @ cast(p["wt0"]) + p["bt"]
        s_pre = cast(x) @ cast(p["ws1"]) + cast(x_shift) @ cast(p["ws0"]) + p["bs"]
        g = jnp.tanh(t_pre) * jax.nn.sigmoid(s_pre)
        res = cast(g) @ cast(p["wr"]) + p["br"] + x
        skip = cast(g) @ cast(p["wk"]) + p["bk"]
        s = jnp.mean(skip, axis=1, keepdims=True)
        skip_sum = s if skip_sum is None else skip_sum + s
        x = res
    return jnp.transpose(skip_sum, (0, 2, 1))                 # (B, Cs, 1)


# ---------------------------------------------------------------------------
# Deterministic synthetic parameters (shapes from the PyTorch __init__;
# wt_k / ws_k correspond to conv.weight[:, :, k].T stored as (Cin, Cout)).
# ---------------------------------------------------------------------------
def make_block_params(key, residual_dim, skip_dim):
    ks = jax.random.split(key, 10)
    sc2 = 1.0 / jnp.sqrt(2.0 * residual_dim)   # Conv1d(k=2) fan-in scale
    sc1 = 1.0 / jnp.sqrt(1.0 * residual_dim)   # Conv1d(k=1) fan-in scale
    f32 = jnp.float32
    return {
        "wt0": sc2 * jax.random.normal(ks[0], (residual_dim, residual_dim), f32),
        "wt1": sc2 * jax.random.normal(ks[1], (residual_dim, residual_dim), f32),
        "bt":  sc2 * jax.random.normal(ks[2], (1, residual_dim), f32),
        "ws0": sc2 * jax.random.normal(ks[3], (residual_dim, residual_dim), f32),
        "ws1": sc2 * jax.random.normal(ks[4], (residual_dim, residual_dim), f32),
        "bs":  sc2 * jax.random.normal(ks[5], (1, residual_dim), f32),
        "wr":  sc1 * jax.random.normal(ks[6], (residual_dim, residual_dim), f32),
        "br":  sc1 * jax.random.normal(ks[7], (1, residual_dim), f32),
        "wk":  sc1 * jax.random.normal(ks[8], (residual_dim, skip_dim), f32),
        "bk":  sc1 * jax.random.normal(ks[9], (1, skip_dim), f32),
    }


if __name__ == "__main__":
    # ResidualStack(stack_size=2, layer_per_stack=3, residual_dim=16, skip_dim=32)
    stack_size, layer_per_stack = 2, 3
    residual_dim, skip_dim = 16, 32
    B, T = 2, 32
    dilations = [2 ** i for i in range(layer_per_stack)] * stack_size   # [1,2,4,1,2,4]

    root = jax.random.PRNGKey(0)
    block_params = [
        make_block_params(jax.random.fold_in(root, i), residual_dim, skip_dim)
        for i in range(len(dilations))
    ]
    x = jax.random.normal(jax.random.fold_in(root, 1234),
                          (B, residual_dim, T), jnp.float32)            # NCW like PyTorch

    out = jax.block_until_ready(residual_stack_forward(x, block_params, dilations))
    assert out.shape == (B, skip_dim, 1), out.shape

    # Tight check vs. a reference that rounds matmul inputs to bf16 exactly as
    # the kernel does (bf16 x bf16 products are exact in the f32 accumulator).
    ref_bf16 = jax.block_until_ready(
        _stack_ref(x, block_params, dilations, matmul_dtype=jnp.bfloat16))
    assert jnp.allclose(out, ref_bf16, atol=1e-3, rtol=1e-3), (
        float(jnp.max(jnp.abs(out - ref_bf16))))

    # Looser sanity check vs. the exact f32 reference (bf16 matmul-input noise).
    ref_f32 = jax.block_until_ready(_stack_ref(x, block_params, dilations))
    assert jnp.allclose(out, ref_f32, atol=1e-1, rtol=1e-1), (
        float(jnp.max(jnp.abs(out - ref_f32))))

    print("KERNEL_OK")
</pallas_src>

<mosaic_0001>
module attributes {stable_mosaic.version = 11 : i64} {
  func.func @_residual_stack_kernel(%arg0: i32, %arg1: i32, %arg2: memref<6xi32, #tpu.memory_space<smem>>, %arg3: memref<64x128xf32, #tpu.memory_space<vmem>>, %arg4: memref<1x256x256xbf16, #tpu.memory_space<vmem>>, %arg5: memref<1x1x256xf32, #tpu.memory_space<vmem>>, %arg6: memref<1x128x256xbf16, #tpu.memory_space<vmem>>, %arg7: memref<1x1x256xf32, #tpu.memory_space<vmem>>, %arg8: memref<2x128xf32, #tpu.memory_space<vmem>>, %arg9: memref<64x128xf32, #tpu.memory_space<vmem>>) attributes {dimension_semantics = [#tpu.dimension_semantics<parallel>, #tpu.dimension_semantics<arbitrary>], iteration_bounds = array<i64: 1, 6>, scalar_prefetch = 1 : i64, scratch_operands = 1 : i64, tpu.core_type = #tpu.core_type<tc>, window_params = [{transform_indices = @transform_0, window_bounds = array<i64: 64, 128>}, {transform_indices = @transform_1, window_bounds = array<i64: 1, 256, 256>}, {transform_indices = @transform_2, window_bounds = array<i64: 1, 1, 256>}, {transform_indices = @transform_3, window_bounds = array<i64: 1, 128, 256>}, {transform_indices = @transform_4, window_bounds = array<i64: 1, 1, 256>}, {transform_indices = @transform_5, window_bounds = array<i64: 2, 128>}]} {
    %c0_i32 = arith.constant 0 : i32
    %0 = arith.cmpi eq, %arg1, %c0_i32 : i32
    %1 = arith.extui %0 : i1 to i32
    %c0_i32_0 = arith.constant 0 : i32
    %2 = arith.cmpi ne, %1, %c0_i32_0 : i32
    scf.if %2 {
      %c0_36 = arith.constant 0 : index
      %c0_37 = arith.constant 0 : index
      %88 = vector.load %arg3[%c0_36, %c0_37] : memref<64x128xf32, #tpu.memory_space<vmem>>, vector<64x128xf32>
      %c0_38 = arith.constant 0 : index
      %c0_39 = arith.constant 0 : index
      %89 = vector.load %arg9[%c0_38, %c0_39] : memref<64x128xf32, #tpu.memory_space<vmem>>, vector<64x128xf32>
      tpu.vector_store %arg9[%c0_38, %c0_39], %88 {strides = array<i32>} : memref<64x128xf32, #tpu.memory_space<vmem>>, vector<64x128xf32>,
      %cst_40 = arith.constant 0.000000e+00 : f32
      %90 = vector.broadcast %cst_40 : f32 to vector<2x128xf32>
      %c0_41 = arith.constant 0 : index
      %c0_42 = arith.constant 0 : index
      %91 = vector.load %arg8[%c0_41, %c0_42] : memref<2x128xf32, #tpu.memory_space<vmem>>, vector<2x128xf32>
      tpu.vector_store %arg8[%c0_41, %c0_42], %90 {strides = array<i32>} : memref<2x128xf32, #tpu.memory_space<vmem>>, vector<2x128xf32>,
    } else {
    }
    %c0 = arith.constant 0 : index
    %c0_1 = arith.constant 0 : index
    %3 = vector.load %arg9[%c0, %c0_1] : memref<64x128xf32, #tpu.memory_space<vmem>>, vector<64x128xf32>
    %4 = arith.index_cast %arg1 : i32 to index
    %5 = memref.load %arg2[%4] : memref<6xi32, #tpu.memory_space<smem>>
    %6 = tpu.iota {dimensions = array<i32: 0>} : vector<64x1xi32>
    %c32_i32 = arith.constant 32 : i32
    %c0_i32_2 = arith.constant 0 : i32
    %7 = arith.cmpi eq, %c32_i32, %c0_i32_2 : i32
    %c1_i32 = arith.constant 1 : i32
    %8 = arith.select %7, %c1_i32, %c32_i32 : i32
    %9 = vector.broadcast %8 : i32 to vector<64x1xi32>
    %10 = arith.remsi %6, %9 : vector<64x1xi32>
    %c0_i32_3 = arith.constant 0 : i32
    %11 = vector.broadcast %c0_i32_3 : i32 to vector<64x1xi32>
    %12 = arith.cmpi ne, %10, %11 : vector<64x1xi32>
    %c0_i32_4 = arith.constant 0 : i32
    %13 = vector.broadcast %c0_i32_4 : i32 to vector<64x1xi32>
    %14 = arith.cmpi slt, %10, %13 : vector<64x1xi32>
    %c0_i32_5 = arith.constant 0 : i32
    %15 = arith.cmpi slt, %8, %c0_i32_5 : i32
    %16 = vector.broadcast %15 : i1 to vector<64x1xi1>
    %17 = vector.broadcast %16 : vector<64x1xi1> to vector<64x1xi1>
    %18 = arith.xori %14, %17 : vector<64x1xi1>
    %19 = arith.andi %18, %12 : vector<64x1xi1>
    %20 = vector.broadcast %8 : i32 to vector<64x1xi32>
    %21 = arith.addi %10, %20 : vector<64x1xi32>
    %22 = arith.select %19, %21, %10 : vector<64x1xi1>, vector<64x1xi32>
    %cst = arith.constant 0.000000e+00 : f32
    %23 = vector.broadcast %cst : f32 to vector<64x128xf32>
    %c1_i32_6 = arith.constant 1 : i32
    %24 = tpu.dynamic_rotate %3 by %c1_i32_6 dim 0 : vector<64x128xf32>, i32 -> vector<64x128xf32>
    %c1_i32_7 = arith.constant 1 : i32
    %25 = arith.cmpi eq, %5, %c1_i32_7 : i32
    %c1_i32_8 = arith.constant 1 : i32
    %26 = vector.broadcast %c1_i32_8 : i32 to vector<64x1xi32>
    %27 = arith.cmpi sge, %22, %26 : vector<64x1xi32>
    %28 = vector.broadcast %25 : i1 to vector<64x1xi1>
    %29 = arith.andi %28, %27 : vector<64x1xi1>
    %30 = vector.shape_cast %29 : vector<64x1xi1> to vector<64x1xi1>
    %31 = vector.broadcast %30 : vector<64x1xi1> to vector<64x128xi1>
    %32 = arith.select %31, %24, %23 : vector<64x128xi1>, vector<64x128xf32>
    %c2_i32 = arith.constant 2 : i32
    %33 = tpu.dynamic_rotate %3 by %c2_i32 dim 0 : vector<64x128xf32>, i32 -> vector<64x128xf32>
    %c2_i32_9 = arith.constant 2 : i32
    %34 = arith.cmpi eq, %5, %c2_i32_9 : i32
    %c2_i32_10 = arith.constant 2 : i32
    %35 = vector.broadcast %c2_i32_10 : i32 to vector<64x1xi32>
    %36 = arith.cmpi sge, %22, %35 : vector<64x1xi32>
    %37 = vector.broadcast %34 : i1 to vector<64x1xi1>
    %38 = arith.andi %37, %36 : vector<64x1xi1>
    %39 = vector.shape_cast %38 : vector<64x1xi1> to vector<64x1xi1>
    %40 = vector.broadcast %39 : vector<64x1xi1> to vector<64x128xi1>
    %41 = arith.select %40, %33, %32 : vector<64x128xi1>, vector<64x128xf32>
    %c4_i32 = arith.constant 4 : i32
    %42 = tpu.dynamic_rotate %3 by %c4_i32 dim 0 : vector<64x128xf32>, i32 -> vector<64x128xf32>
    %c4_i32_11 = arith.constant 4 : i32
    %43 = arith.cmpi eq, %5, %c4_i32_11 : i32
    %c4_i32_12 = arith.constant 4 : i32
    %44 = vector.broadcast %c4_i32_12 : i32 to vector<64x1xi32>
    %45 = arith.cmpi sge, %22, %44 : vector<64x1xi32>
    %46 = vector.broadcast %43 : i1 to vector<64x1xi1>
    %47 = arith.andi %46, %45 : vector<64x1xi1>
    %48 = vector.shape_cast %47 : vector<64x1xi1> to vector<64x1xi1>
    %49 = vector.broadcast %48 : vector<64x1xi1> to vector<64x128xi1>
    %50 = arith.select %49, %42, %41 : vector<64x128xi1>, vector<64x128xf32>
    %51 = tpu.concatenate %3, %50 in 1 : vector<64x128xf32>, vector<64x128xf32> -> vector<64x256xf32>
    %52 = arith.truncf %51 : vector<64x256xf32> to vector<64x256xbf16>
    %c0_13 = arith.constant 0 : index
    %c0_14 = arith.constant 0 : index
    %c0_15 = arith.constant 0 : index
    %53 = vector.load %arg4[%c0_13, %c0_14, %c0_15] : memref<1x256x256xbf16, #tpu.memory_space<vmem>>, vector<1x256x256xbf16>
    %54 = vector.shape_cast %53 : vector<1x256x256xbf16> to vector<256x256xbf16>
    %cst_16 = arith.constant dense<0.000000e+00> : vector<64x256xf32>
    %55 = tpu.matmul %52, %54, %cst_16 {dimension_numbers = #tpu.dot_dimension_numbers<[1], [0], [0], [1], [0, 0, 1, 1], [], []>} : vector<64x256xbf16>, vector<256x256xbf16>, vector<64x256xf32> -> vector<64x256xf32>
    %c0_17 = arith.constant 0 : index
    %c0_18 = arith.constant 0 : index
    %c0_19 = arith.constant 0 : index
    %56 = vector.load %arg5[%c0_17, %c0_18, %c0_19] : memref<1x1x256xf32, #tpu.memory_space<vmem>>, vector<1x1x256xf32>
    %57 = vector.shape_cast %56 : vector<1x1x256xf32> to vector<1x256xf32>
    %58 = vector.broadcast %57 : vector<1x256xf32> to vector<64x256xf32>
    %59 = arith.addf %55, %58 : vector<64x256xf32>
    %60 = vector.extract_strided_slice %59 {offsets = [0, 0], sizes = [64, 128], strides = [1, 1]} : vector<64x256xf32> to vector<64x128xf32>
    %61 = math.tanh %60 : vector<64x128xf32>
    %62 = vector.extract_strided_slice %59 {offsets = [0, 128], sizes = [64, 128], strides = [1, 1]} : vector<64x256xf32> to vector<64x128xf32>
    %63 = arith.negf %62 : vector<64x128xf32>
    %64 = math.exp %63 : vector<64x128xf32>
    %cst_20 = arith.constant 1.000000e+00 : f32
    %65 = vector.broadcast %cst_20 : f32 to vector<64x128xf32>
    %66 = arith.addf %65, %64 : vector<64x128xf32>
    %67 = arith.divf %65, %66 : vector<64x128xf32>
    %68 = arith.mulf %61, %67 : vector<64x128xf32>
    %69 = arith.truncf %68 : vector<64x128xf32> to vector<64x128xbf16>
    %c0_21 = arith.constant 0 : index
    %c0_22 = arith.constant 0 : index
    %c0_23 = arith.constant 0 : index
    %70 = vector.load %arg6[%c0_21, %c0_22, %c0_23] : memref<1x128x256xbf16, #tpu.memory_space<vmem>>, vector<1x128x256xbf16>
    %71 = vector.shape_cast %70 : vector<1x128x256xbf16> to vector<128x256xbf16>
    %cst_24 = arith.constant dense<0.000000e+00> : vector<64x256xf32>
    %72 = tpu.matmul %69, %71, %cst_24 {dimension_numbers = #tpu.dot_dimension_numbers<[1], [0], [0], [1], [0, 0, 1, 1], [], []>} : vector<64x128xbf16>, vector<128x256xbf16>, vector<64x256xf32> -> vector<64x256xf32>
    %c0_25 = arith.constant 0 : index
    %c0_26 = arith.constant 0 : index
    %c0_27 = arith.constant 0 : index
    %73 = vector.load %arg7[%c0_25, %c0_26, %c0_27] : memref<1x1x256xf32, #tpu.memory_space<vmem>>, vector<1x1x256xf32>
    %74 = vector.shape_cast %73 : vector<1x1x256xf32> to vector<1x256xf32>
    %75 = vector.broadcast %74 : vector<1x256xf32> to vector<64x256xf32>
    %76 = arith.addf %72, %75 : vector<64x256xf32>
    %77 = vector.extract_strided_slice %76 {offsets = [0, 0], sizes = [64, 128], strides = [1, 1]} : vector<64x256xf32> to vector<64x128xf32>
    %78 = arith.addf %3, %77 : vector<64x128xf32>
    %c0_28 = arith.constant 0 : index
    %c0_29 = arith.constant 0 : index
    %79 = vector.load %arg9[%c0_28, %c0_29] : memref<64x128xf32, #tpu.memory_space<vmem>>, vector<64x128xf32>
    tpu.vector_store %arg9[%c0_28, %c0_29], %78 {strides = array<i32>} : memref<64x128xf32, #tpu.memory_space<vmem>>, vector<64x128xf32>,
    %80 = vector.extract_strided_slice %76 {offsets = [0, 128], sizes = [64, 128], strides = [1, 1]} : vector<64x256xf32> to vector<64x128xf32>
    %81 = vector.shape_cast %80 : vector<64x128xf32> to vector<2x32x128xf32>
    %cst_30 = arith.constant dense<0.000000e+00> : vector<2x128xf32>
    %82 = vector.multi_reduction <add>, %81, %cst_30 [1] : vector<2x32x128xf32> to vector<2x128xf32>
    %c0_31 = arith.constant 0 : index
    %c0_32 = arith.constant 0 : index
    %83 = vector.load %arg8[%c0_31, %c0_32] : memref<2x128xf32, #tpu.memory_space<vmem>>, vector<2x128xf32>
    %cst_33 = arith.constant 3.125000e-02 : f32
    %84 = vector.broadcast %cst_33 : f32 to vector<2x128xf32>
    %85 = arith.mulf %82, %84 : vector<2x128xf32>
    %86 = arith.addf %83, %85 : vector<2x128xf32>
    %c0_34 = arith.constant 0 : index
    %c0_35 = arith.constant 0 : index
    %87 = vector.load %arg8[%c0_34, %c0_35] : memref<2x128xf32, #tpu.memory_space<vmem>>, vector<2x128xf32>
    tpu.vector_store %arg8[%c0_34, %c0_35], %86 {strides = array<i32>} : memref<2x128xf32, #tpu.memory_space<vmem>>, vector<2x128xf32>,
    return
  }
  func.func @transform_0(%arg0: i32, %arg1: i32, %arg2: memref<6xi32, #tpu.memory_space<smem>>) -> (i32, i32) {
    %c0_i32 = arith.constant 0 : i32
    %c0_i32_0 = arith.constant 0 : i32
    return %arg0, %c0_i32 : i32, i32
  }
  func.func @transform_1(%arg0: i32, %arg1: i32, %arg2: memref<6xi32, #tpu.memory_space<smem>>) -> (i32, i32, i32) {
    %c0_i32 = arith.constant 0 : i32
    %c0_i32_0 = arith.constant 0 : i32
    %c0_i32_1 = arith.constant 0 : i32
    return %arg1, %c0_i32, %c0_i32_0 : i32, i32, i32
  }
  func.func @transform_2(%arg0: i32, %arg1: i32, %arg2: memref<6xi32, #tpu.memory_space<smem>>) -> (i32, i32, i32) {
    %c0_i32 = arith.constant 0 : i32
    %c0_i32_0 = arith.constant 0 : i32
    %c0_i32_1 = arith.constant 0 : i32
    return %arg1, %c0_i32, %c0_i32_0 : i32, i32, i32
  }
  func.func @transform_3(%arg0: i32, %arg1: i32, %arg2: memref<6xi32, #tpu.memory_space<smem>>) -> (i32, i32, i32) {
    %c0_i32 = arith.constant 0 : i32
    %c0_i32_0 = arith.constant 0 : i32
    %c0_i32_1 = arith.constant 0 : i32
    return %arg1, %c0_i32, %c0_i32_0 : i32, i32, i32
  }
  func.func @transform_4(%arg0: i32, %arg1: i32, %arg2: memref<6xi32, #tpu.memory_space<smem>>) -> (i32, i32, i32) {
    %c0_i32 = arith.constant 0 : i32
    %c0_i32_0 = arith.constant 0 : i32
    %c0_i32_1 = arith.constant 0 : i32
    return %arg1, %c0_i32, %c0_i32_0 : i32, i32, i32
  }
  func.func @transform_5(%arg0: i32, %arg1: i32, %arg2: memref<6xi32, #tpu.memory_space<smem>>) -> (i32, i32) {
    %c0_i32 = arith.constant 0 : i32
    %c0_i32_0 = arith.constant 0 : i32
    return %arg0, %c0_i32 : i32, i32
  }
}

</mosaic_0001>

<llo_original>
// kernel: tpu_custom_call.1
$region0: #{tpu_custom_call.1}
  #allocation0 [shape = 'u32[]', space=smem, size = 0x4, offset = 0x4, fixed_abs, tag = 'smem constant byte address 0x4 - core index']
  #allocation1 [shape = 'u32[144,128]{1,0:T(1,128)}', space=vmem, size = 0x12000, scoped, tag = 'internal scratch']
  #allocation2 [shape = 'f32[64,128]{1,0:T(8,128)}', space=vmem, size = 0x8000, scoped, tag = 'scratch operand']
  #allocation3 [shape = 's32[1]{0}', space=sflag, size = 0x4, scoped, tag = 'scoped memory for tpu_custom_call.1']
  #allocation4 [shape = 'u8[512]{0}', space=smem, size = 0x200, scoped, tag = 'prefetched SMEM operand 0']
  %s0 = inlined_call_operand.hbm [shape: s32[6], index: 0, kind: input, shape index: {}]
  %s1 = inlined_call_operand.hbm [shape: f32[64,128], index: 1, kind: input, shape index: {}]
  %s2 = inlined_call_operand.hbm [shape: bf16[6,256,256], index: 2, kind: input, shape index: {}]
  %s3 = inlined_call_operand.hbm [shape: f32[6,1,256], index: 3, kind: input, shape index: {}]
  %s4 = inlined_call_operand.hbm [shape: bf16[6,128,256], index: 4, kind: input, shape index: {}]
  %s5 = inlined_call_operand.vmem [shape: f32[6,1,256], index: 5, kind: input, shape index: {}]
  %s6 = inlined_call_operand.hbm [shape: f32[2,128], index: 6, kind: output, shape index: {}]
  %s7 = sld [smem:[#allocation0]]
  $region73: #{tpu_custom_call.1} parent=0
    _
  %s9 = ssub.s32 1, %s7
  %s10 = scalar_select 0, %s9, %s7
  %12 = dma.hbm_to_smem %s0, 16, [#allocation4], [#allocation3]
  %13 = dma.done [#allocation3], 16
  %14 = sfence
  $region1: #{tpu_custom_call.1} parent=0
    #allocation5 [shape = 'u8[32768]{0}', space=vmem, size = 0x8000, scoped, tag = 'input window, operand 1, single buffered']
    #allocation6 [shape = 's32[2]{0}', space=sflag, size = 0x8, scoped, tag = 'scoped memory for tpu_custom_call.1']
    #allocation7 [shape = 's32[2]{0}', space=sflag, size = 0x8, scoped, tag = 'scoped memory for tpu_custom_call.1']
    #allocation8 [shape = 'u8[262144]{0}', space=vmem, size = 0x40000, scoped, tag = 'input window, operand 2']
    #allocation9 [shape = 's32[2]{0}', space=sflag, size = 0x8, scoped, tag = 'scoped memory for tpu_custom_call.1']
    #allocation10 [shape = 'u8[2048]{0}', space=vmem, size = 0x800, scoped, tag = 'input window, operand 3']
    #allocation11 [shape = 'u8[131072]{0}', space=vmem, size = 0x20000, scoped, tag = 'input window, operand 4']
    #allocation12 [shape = 's32[2]{0}', space=sflag, size = 0x8, scoped, tag = 'scoped memory for tpu_custom_call.1']
    #allocation13 [shape = 'u8[1024]{0}', space=vmem, size = 0x400, scoped, tag = 'output window, operand 0, single buffered']
    %15 = vsyncpa [#allocation6], 0
    %16 = vsyncpa [#allocation9], 0
    %s17 = scalar_lea.sflag [#allocation9], 1
    %18 = vsyncpa %s17, 0
    %19 = vsyncpa [#allocation12], 0
    %s20 = scalar_lea.sflag [#allocation12], 1
    %21 = vsyncpa %s20, 0
    %22 = vsyncpa [#allocation7], 0
    loop: start=0, step=1, limit=8
    $region2: #{tpu_custom_call.1} parent=1 // loop_pre_header
      _
    $region3: #{tpu_custom_call.1} parent=1 // loop_header
      %s24 = sphi 0, %s28
      %p25 = scmp.ge.s32.totalorder %s24, 8
      %s31 = sphi 0, %s43
      %s32 = sphi 0, %s39
      %s33 = sphi 0, %s31
      %s34 = sphi 0, %s32
      %s35 = sphi 0, %s33
      %s36 = sphi 0, %s34
      %s46 = sphi 0, %s48
      %s49 = sphi 0, %s46
      %s50 = sphi 0, %s49
      %s66 = sphi 0, %s50
      %s72 = sphi 0, %s74
      %s75 = sphi 0, %s72
      %s76 = sphi 0, %s75
      %s92 = sphi 0, %s76
      %s98 = sphi 0, %s100
      %s101 = sphi 0, %s98
      %s102 = sphi 0, %s101
      %s118 = sphi 0, %s102
      %s124 = sphi 0, %s126
      %s127 = sphi 0, %s124
      %s128 = sphi 0, %s127
      %s144 = sphi 0, %s128
      %s150 = sphi 0, %s152
      %s153 = sphi 0, %s150
      %s154 = sphi 0, %s153
      %s170 = sphi 0, %s154
      %s176 = sphi 0, %s178
      %s179 = sphi 0, %s176
      %s180 = sphi 0, %s179
      %s196 = sphi 0, %s180
    $region4: #{tpu_custom_call.1} parent=1 // loop_header_branch
      %27 = sbr.rel (%p25) target = $region8
    $region5: #{tpu_custom_call.1} parent=1 // loop_body
      %s29 = ssub.s32 %s24, 1
      %s30 = ssub.s32 %s24, 2
      %s37 = sadd.s32 1, %s32
      %p38 = scmp.ge.s32.totalorder %s37, 6
      %s39 = scalar_select %p38, 0, %s37
      %s40 = sadd.s32 1, %s31
      %s41 = scalar_select %p38, %s40, %s31
      %p42 = scmp.ge.s32.totalorder %s41, 1
      %s43 = scalar_select %p42, 0, %s41
      %s44 = ssub.s32 %s31, %s43
      %p45 = scmp.eq.s32.totalorder %s44, 0
      %s47 = sadd.s32 %s46, 1
      %s48 = scalar_select %p45, %s46, %s47
      %p51 = pneg %p45
      %p52 = scmp.eq.s32.totalorder %s24, 5
      %p53 = por %p51, %p52
      %p54 = scmp.ne.s32.totalorder %s46, %s49
      %p55 = scmp.eq.s32.totalorder %s24, 0
      %p56 = por %p54, %p55
      %p57 = scmp.ne.s32.totalorder %s46, %s49
      %p58 = scmp.eq.s32.totalorder %s29, 5
      %p59 = por %p57, %p58
      %p60 = scmp.ne.s32.totalorder %s49, %s50
      %p61 = scmp.eq.s32.totalorder %s29, 0
      %p62 = por %p60, %p61
      %p63 = scmp.ne.s32.totalorder %s49, %s50
      %p64 = scmp.eq.s32.totalorder %s30, 5
      %p65 = por %p63, %p64
      %p67 = scmp.ne.s32.totalorder %s50, %s66
      %p68 = scmp.eq.s32.totalorder %s30, 0
      %p69 = por %p67, %p68
      %s70 = ssub.s32 %s32, %s39
      %p71 = scmp.eq.s32.totalorder %s70, 0
      %s73 = sadd.s32 %s72, 1
      %s74 = scalar_select %p71, %s72, %s73
      %p77 = pneg %p71
      %p78 = scmp.eq.s32.totalorder %s24, 5
      %p79 = por %p77, %p78
      %p80 = scmp.ne.s32.totalorder %s72, %s75
      %p81 = scmp.eq.s32.totalorder %s24, 0
      %p82 = por %p80, %p81
      %p83 = scmp.ne.s32.totalorder %s72, %s75
      %p84 = scmp.eq.s32.totalorder %s29, 5
      %p85 = por %p83, %p84
      %p86 = scmp.ne.s32.totalorder %s75, %s76
      %p87 = scmp.eq.s32.totalorder %s29, 0
      %p88 = por %p86, %p87
      %p89 = scmp.ne.s32.totalorder %s75, %s76
      %p90 = scmp.eq.s32.totalorder %s30, 5
      %p91 = por %p89, %p90
      %p93 = scmp.ne.s32.totalorder %s76, %s92
      %p94 = scmp.eq.s32.totalorder %s30, 0
      %p95 = por %p93, %p94
      %s96 = ssub.s32 %s32, %s39
      %p97 = scmp.eq.s32.totalorder %s96, 0
      %s99 = sadd.s32 %s98, 1
      %s100 = scalar_select %p97, %s98, %s99
      %p103 = pneg %p97
      %p104 = scmp.eq.s32.totalorder %s24, 5
      %p105 = por %p103, %p104
      %p106 = scmp.ne.s32.totalorder %s98, %s101
      %p107 = scmp.eq.s32.totalorder %s24, 0
      %p108 = por %p106, %p107
      %p109 = scmp.ne.s32.totalorder %s98, %s101
      %p110 = scmp.eq.s32.totalorder %s29, 5
      %p111 = por %p109, %p110
      %p112 = scmp.ne.s32.totalorder %s101, %s102
      %p113 = scmp.eq.s32.totalorder %s29, 0
      %p114 = por %p112, %p113
      %p115 = scmp.ne.s32.totalorder %s101, %s102
      %p116 = scmp.eq.s32.totalorder %s30, 5
      %p117 = por %p115, %p116
      %p119 = scmp.ne.s32.totalorder %s102, %s118
      %p120 = scmp.eq.s32.totalorder %s30, 0
      %p121 = por %p119, %p120
      %s122 = ssub.s32 %s32, %s39
      %p123 = scmp.eq.s32.totalorder %s122, 0
      %s125 = sadd.s32 %s124, 1
      %s126 = scalar_select %p123, %s124, %s125
      %p129 = pneg %p123
      %p130 = scmp.eq.s32.totalorder %s24, 5
      %p131 = por %p129, %p130
      %p132 = scmp.ne.s32.totalorder %s124, %s127
      %p133 = scmp.eq.s32.totalorder %s24, 0
      %p134 = por %p132, %p133
      %p135 = scmp.ne.s32.totalorder %s124, %s127
      %p136 = scmp.eq.s32.totalorder %s29, 5
      %p137 = por %p135, %p136
      %p138 = scmp.ne.s32.totalorder %s127, %s128
      %p139 = scmp.eq.s32.totalorder %s29, 0
      %p140 = por %p138, %p139
      %p141 = scmp.ne.s32.totalorder %s127, %s128
      %p142 = scmp.eq.s32.totalorder %s30, 5
      %p143 = por %p141, %p142
      %p145 = scmp.ne.s32.totalorder %s128, %s144
      %p146 = scmp.eq.s32.totalorder %s30, 0
      %p147 = por %p145, %p146
      %s148 = ssub.s32 %s32, %s39
      %p149 = scmp.eq.s32.totalorder %s148, 0
      %s151 = sadd.s32 %s150, 1
      %s152 = scalar_select %p149, %s150, %s151
      %p155 = pneg %p149
      %p156 = scmp.eq.s32.totalorder %s24, 5
      %p157 = por %p155, %p156
      %p158 = scmp.ne.s32.totalorder %s150, %s153
      %p159 = scmp.eq.s32.totalorder %s24, 0
      %p160 = por %p158, %p159
      %p161 = scmp.ne.s32.totalorder %s150, %s153
      %p162 = scmp.eq.s32.totalorder %s29, 5
      %p163 = por %p161, %p162
      %p164 = scmp.ne.s32.totalorder %s153, %s154
      %p165 = scmp.eq.s32.totalorder %s29, 0
      %p166 = por %p164, %p165
      %p167 = scmp.ne.s32.totalorder %s153, %s154
      %p168 = scmp.eq.s32.totalorder %s30, 5
      %p169 = por %p167, %p168
      %p171 = scmp.ne.s32.totalorder %s154, %s170
      %p172 = scmp.eq.s32.totalorder %s30, 0
      %p173 = por %p171, %p172
      %s174 = ssub.s32 %s31, %s43
      %p175 = scmp.eq.s32.totalorder %s174, 0
      %s177 = sadd.s32 %s176, 1
      %s178 = scalar_select %p175, %s176, %s177
      %p181 = pneg %p175
      %p182 = scmp.eq.s32.totalorder %s24, 5
      %p183 = por %p181, %p182
      %p184 = scmp.ne.s32.totalorder %s176, %s179
      %p185 = scmp.eq.s32.totalorder %s24, 0
      %p186 = por %p184, %p185
      %p187 = scmp.ne.s32.totalorder %s176, %s179
      %p188 = scmp.eq.s32.totalorder %s29, 5
      %p189 = por %p187, %p188
      %p190 = scmp.ne.s32.totalorder %s179, %s180
      %p191 = scmp.eq.s32.totalorder %s29, 0
      %p192 = por %p190, %p191
      %p193 = scmp.ne.s32.totalorder %s179, %s180
      %p194 = scmp.eq.s32.totalorder %s30, 5
      %p195 = por %p193, %p194
      %p197 = scmp.ne.s32.totalorder %s180, %s196
      %p198 = scmp.eq.s32.totalorder %s30, 0
      %p199 = por %p197, %p198
      %p200 = scmp.le.s32.totalorder 1, %s24
      %p201 = scmp.lt.s32.totalorder %s24, 7
      %p202 = pnand %p200, %p201
      %p203 = pneg %p202
      // Predicated region
      $region9: #{tpu_custom_call.1} parent=5 // pred_check
        _
      $region10: #{tpu_custom_call.1} parent=5 // pred_check_branch
        %205 = sbr.rel (%p202) target = $region12
      $region11: #{tpu_custom_call.1} parent=5 // pred_region
        %s206 = ssub.s32 %s24, 1
        // Predicated region
        $region13: #{tpu_custom_call.1} parent=11 // pred_check
          %p207 = pneg %p62
        $region14: #{tpu_custom_call.1} parent=11 // pred_check_branch
          %209 = sbr.rel (%p207) target = $region16
        $region15: #{tpu_custom_call.1} parent=11 // pred_region
          %s210 = smul.u32 8, %s33
          %s212 = ssub.s32 1024, 1024
          %213 = vsyncadd [#allocation6], %s212
          %s214 = smul.addr %s210, 128
          %s215 = scalar_lea.hbm %s1, %s214
          %s216 = sshll.u32 [#allocation5], 4
          %s217 = int_to_ptr.vmem [resolvable:$true] %s216
          %222 = dma.hbm_to_vmem [thread:$0]  %s215, 1024, %s217, [#allocation6], 128, 128, 8
        $region16: #{tpu_custom_call.1} parent=11 // pred_fallthru
          _
      $region12: #{tpu_custom_call.1} parent=5 // pred_fallthru
        _
      %p223 = scmp.lt.s32.totalorder %s24, 6
      // Predicated region
      $region17: #{tpu_custom_call.1} parent=5 // pred_check
        %p224 = pneg %p223
      $region18: #{tpu_custom_call.1} parent=5 // pred_check_branch
        %226 = sbr.rel (%p224) target = $region20
      $region19: #{tpu_custom_call.1} parent=5 // pred_region
        // Predicated region
        $region21: #{tpu_custom_call.1} parent=19 // pred_check
          %p227 = pneg %p82
        $region22: #{tpu_custom_call.1} parent=19 // pred_check_branch
          %229 = sbr.rel (%p227) target = $region24
        $region23: #{tpu_custom_call.1} parent=19 // pred_region
          %s230 = sand.u32 %s24, 1
          %s231 = scalar_lea.sflag [#allocation9], %s230
          %s232 = sand.u32 %s72, 1
          %s233 = smul.addr %s232, 256
          %s234 = scalar_lea.vmem [#allocation8], %s233
          %s236 = ssub.s32 4096, 4096
          %237 = vsyncadd %s231, %s236
          %s238 = smul.addr %s32, 64
          %s239 = smul.addr %s238, 64
          %s240 = scalar_lea.hbm %s2, %s239
          %s241 = sshll.u32 %s234, 4
          %s242 = int_to_ptr.vmem [resolvable:$true] %s241
          %247 = dma.hbm_to_vmem [thread:$0]  %s240, 4096, %s242, %s231, 128, 128, 8
        $region24: #{tpu_custom_call.1} parent=19 // pred_fallthru
          _
        // Predicated region
        $region25: #{tpu_custom_call.1} parent=19 // pred_check
          %p248 = pneg %p108
        $region26: #{tpu_custom_call.1} parent=19 // pred_check_branch
          %250 = sbr.rel (%p248) target = $region28
        $region27: #{tpu_custom_call.1} parent=19 // pred_region
          %s251 = sand.u32 %s24, 1
          %s252 = scalar_lea.sflag [#allocation9], %s251
          %s253 = sand.u32 %s98, 1
          %s254 = smul.addr %s253, 2
          %s255 = scalar_lea.vmem [#allocation10], %s254
          %s257 = ssub.s32 32, 32
          %258 = vsyncadd %s252, %s257
          %s259 = smul.addr %s32, 2
          %s260 = smul.addr %s259, 16
          %s261 = scalar_lea.hbm %s3, %s260
          %s263 = sshll.u32 %s255, 4
          %s264 = int_to_ptr.vmem [resolvable:$true] %s263
          %266 = dma.hbm_to_vmem [thread:$0]  %s261, 32, %s264, %s252
        $region28: #{tpu_custom_call.1} parent=19 // pred_fallthru
          _
        // Predicated region
        $region29: #{tpu_custom_call.1} parent=19 // pred_check
          %p267 = pneg %p134
        $region30: #{tpu_custom_call.1} parent=19 // pred_check_branch
          %269 = sbr.rel (%p267) target = $region32
        $region31: #{tpu_custom_call.1} parent=19 // pred_region
          %s270 = sand.u32 %s124, 1
          %s271 = scalar_lea.sflag [#allocation12], %s270
          %s272 = sand.u32 %s124, 1
          %s273 = smul.addr %s272, 128
          %s274 = scalar_lea.vmem [#allocation11], %s273
          %s276 = ssub.s32 2048, 2048
          %277 = vsyncadd %s271, %s276
          %s278 = smul.addr %s32, 32
          %s279 = smul.addr %s278, 64
          %s280 = scalar_lea.hbm %s4, %s279
          %s281 = sshll.u32 %s274, 4
          %s282 = int_to_ptr.vmem [resolvable:$true] %s281
          %287 = dma.hbm_to_vmem [thread:$0]  %s280, 2048, %s282, %s271, 128, 128, 8
        $region32: #{tpu_custom_call.1} parent=19 // pred_fallthru
          _
        // Predicated region
        $region33: #{tpu_custom_call.1} parent=19 // pred_check
          %p288 = pneg %p160
        $region34: #{tpu_custom_call.1} parent=19 // pred_check_branch
          %290 = sbr.rel (%p288) target = $region36
        $region35: #{tpu_custom_call.1} parent=19 // pred_region
          %p291 = scmp.lt.s32.totalorder %s32, 5
          %s292 = scalar_select %p291, %s32, 5
          %s293 = smul.addr %s292, 2
          %s294 = scalar_lea.vmem %s5, %s293
        $region36: #{tpu_custom_call.1} parent=19 // pred_fallthru
          _
      $region20: #{tpu_custom_call.1} parent=5 // pred_fallthru
        _
      %p295 = scmp.le.s32.totalorder 1, %s24
      %p296 = scmp.lt.s32.totalorder %s24, 7
      %p297 = pnand %p295, %p296
      %p298 = pneg %p297
      // Predicated region
      $region37: #{tpu_custom_call.1} parent=5 // pred_check
        _
      $region38: #{tpu_custom_call.1} parent=5 // pred_check_branch
        %300 = sbr.rel (%p297) target = $region40
      $region39: #{tpu_custom_call.1} parent=5 // pred_region
        %s301 = ssub.s32 %s24, 1
        // Predicated region
        $region41: #{tpu_custom_call.1} parent=39 // pred_check
          %p302 = pneg %p62
        $region42: #{tpu_custom_call.1} parent=39 // pred_check_branch
          %304 = sbr.rel (%p302) target = $region44
        $region43: #{tpu_custom_call.1} parent=39 // pred_region
          %305 = dma.done [#allocation6], 1024
        $region44: #{tpu_custom_call.1} parent=39 // pred_fallthru
          _
        %s306 = sand.u32 %s29, 1
        %s307 = scalar_lea.sflag [#allocation9], %s306
        %s308 = sand.u32 %s75, 1
        %s309 = smul.addr %s308, 256
        %s310 = scalar_lea.vmem [#allocation8], %s309
        // Predicated region
        $region45: #{tpu_custom_call.1} parent=39 // pred_check
          %p311 = pneg %p88
        $region46: #{tpu_custom_call.1} parent=39 // pred_check_branch
          %313 = sbr.rel (%p311) target = $region48
        $region47: #{tpu_custom_call.1} parent=39 // pred_region
          %314 = dma.done %s307, 4096
        $region48: #{tpu_custom_call.1} parent=39 // pred_fallthru
          _
        %s315 = sand.u32 %s29, 1
        %s316 = scalar_lea.sflag [#allocation9], %s315
        %s317 = sand.u32 %s101, 1
        %s318 = smul.addr %s317, 2
        %s319 = scalar_lea.vmem [#allocation10], %s318
        // Predicated region
        $region49: #{tpu_custom_call.1} parent=39 // pred_check
          %p320 = pneg %p114
        $region50: #{tpu_custom_call.1} parent=39 // pred_check_branch
          %322 = sbr.rel (%p320) target = $region52
        $region51: #{tpu_custom_call.1} parent=39 // pred_region
          %323 = dma.done %s316, 32
        $region52: #{tpu_custom_call.1} parent=39 // pred_fallthru
          _
        %s324 = sand.u32 %s127, 1
        %s325 = scalar_lea.sflag [#allocation12], %s324
        %s326 = sand.u32 %s127, 1
        %s327 = smul.addr %s326, 128
        %s328 = scalar_lea.vmem [#allocation11], %s327
        // Predicated region
        $region53: #{tpu_custom_call.1} parent=39 // pred_check
          %p329 = pneg %p140
        $region54: #{tpu_custom_call.1} parent=39 // pred_check_branch
          %331 = sbr.rel (%p329) target = $region56
        $region55: #{tpu_custom_call.1} parent=39 // pred_region
          %332 = dma.done %s325, 2048
        $region56: #{tpu_custom_call.1} parent=39 // pred_fallthru
          _
        %p333 = pneg %p62
        %p334 = pneg %p59
        %s335 = sand.u32 %s29, 1
        %s336 = scalar_lea.sflag [#allocation9], %s335
        %s337 = sand.u32 %s75, 1
        %s338 = smul.addr %s337, 256
        %s339 = scalar_lea.vmem [#allocation8], %s338
        %p340 = pneg %p88
        %p341 = pneg %p85
        %s342 = sand.u32 %s29, 1
        %s343 = scalar_lea.sflag [#allocation9], %s342
        %s344 = sand.u32 %s101, 1
        %s345 = smul.addr %s344, 2
        %s346 = scalar_lea.vmem [#allocation10], %s345
        %p347 = pneg %p114
        %p348 = pneg %p111
        %s349 = sand.u32 %s127, 1
        %s350 = scalar_lea.sflag [#allocation12], %s349
        %s351 = sand.u32 %s127, 1
        %s352 = smul.addr %s351, 128
        %s353 = scalar_lea.vmem [#allocation11], %s352
        %p354 = pneg %p140
        %p355 = pneg %p137
        %p356 = scmp.lt.s32.totalorder %s34, 5
        %s357 = scalar_select %p356, %s34, 5
        %s358 = smul.addr %s357, 2
        %s359 = scalar_lea.vmem %s5, %s358
        %p360 = pneg %p166
        %p361 = pneg %p163
        %p362 = pneg %p192
        %p363 = pneg %p189
        %s364 = smul.u32 8, %s33
        %p365 = scmp.lt.s32.totalorder %s34, 5
        %s366 = scalar_select %p365, %s34, 5
        %s367 = smul.addr %s366, 2
        %s368 = scalar_lea.vmem %s5, %s367
        %p370 = scmp.eq.s32.totalorder %s34, 0
        // Predicated region
        $region57: #{tpu_custom_call.1} parent=39 // pred_check
          %p371 = pneg %p370
        $region58: #{tpu_custom_call.1} parent=39 // pred_check_branch
          %373 = sbr.rel (%p371) target = $region60
        $region59: #{tpu_custom_call.1} parent=39 // pred_region
          %v374 = vld [vmem:[#allocation5] sm:$0xff]
          %v375 = vld [vmem:[#allocation5 + $0x8] sm:$0xff]
          %v376 = vld [vmem:[#allocation5 + $0x10] sm:$0xff]
          %v377 = vld [vmem:[#allocation5 + $0x18] sm:$0xff]
          %v378 = vld [vmem:[#allocation5 + $0x20] sm:$0xff]
          %v379 = vld [vmem:[#allocation5 + $0x28] sm:$0xff]
          %v380 = vld [vmem:[#allocation5 + $0x30] sm:$0xff]
          %v381 = vld [vmem:[#allocation5 + $0x38] sm:$0xff]
          %382 = vst [vmem:[#allocation2] sm:$0xff] %v374
          %383 = vst [vmem:[#allocation2 + $0x8] sm:$0xff] %v375
          %384 = vst [vmem:[#allocation2 + $0x10] sm:$0xff] %v376
          %385 = vst [vmem:[#allocation2 + $0x18] sm:$0xff] %v377
          %386 = vst [vmem:[#allocation2 + $0x20] sm:$0xff] %v378
          %387 = vst [vmem:[#allocation2 + $0x28] sm:$0xff] %v379
          %388 = vst [vmem:[#allocation2 + $0x30] sm:$0xff] %v380
          %389 = vst [vmem:[#allocation2 + $0x38] sm:$0xff] %v381
          %390 = vst [vmem:[#allocation13] sm:$0x3] 0.0
        $region60: #{tpu_custom_call.1} parent=39 // pred_fallthru
          _
        %v391 = vld [vmem:[#allocation2] sm:$0xff]
        %v392 = vld [vmem:[#allocation2 + $0x8] sm:$0xff]
        %v393 = vld [vmem:[#allocation2 + $0x10] sm:$0xff]
        %v394 = vld [vmem:[#allocation2 + $0x18] sm:$0xff]
        %v395 = vld [vmem:[#allocation2 + $0x20] sm:$0xff]
        %v396 = vld [vmem:[#allocation2 + $0x28] sm:$0xff]
        %v397 = vld [vmem:[#allocation2 + $0x30] sm:$0xff]
        %v398 = vld [vmem:[#allocation2 + $0x38] sm:$0xff]
        %s399 = sld [smem:[#allocation4 + %s34]]
        %v400 = vlaneseq
        %v401 = vshrl.u32 %v400, 7
        %v402 = vadd.s32 %v401, 8
        %v403 = vadd.s32 %v401, 16
        %v404 = vadd.s32 %v401, 24
        %v405 = vadd.s32 %v401, 32
        %v406 = vadd.s32 %v401, 40
        %v407 = vadd.s32 %v401, 48
        %v408 = vadd.s32 %v401, 56
        %vm409 = vcmp.lt.s32.totalorder %v401, 0
        %v410 = vsub.s32 0, %v401
        %v411 = vsel %vm409, %v410, %v401
        %v412 = vshrl.u32 %v411, 5
        %v413 = vand.u32 %v411, 31
        %v414 = vsub.s32 0, %v413
        %v415 = vsel %vm409, %v414, %v413
        %vm416 = vcmp.lt.s32.totalorder %v402, 0
        %v417 = vsub.s32 0, %v402
        %v418 = vsel %vm416, %v417, %v402
        %v419 = vshrl.u32 %v418, 5
        %v420 = vand.u32 %v418, 31
        %v421 = vsub.s32 0, %v420
        %v422 = vsel %vm416, %v421, %v420
        %vm423 = vcmp.lt.s32.totalorder %v403, 0
        %v424 = vsub.s32 0, %v403
        %v425 = vsel %vm423, %v424, %v403
        %v426 = vshrl.u32 %v425, 5
        %v427 = vand.u32 %v425, 31
        %v428 = vsub.s32 0, %v427
        %v429 = vsel %vm423, %v428, %v427
        %vm430 = vcmp.lt.s32.totalorder %v404, 0
        %v431 = vsub.s32 0, %v404
        %v432 = vsel %vm430, %v431, %v404
        %v433 = vshrl.u32 %v432, 5
        %v434 = vand.u32 %v432, 31
        %v435 = vsub.s32 0, %v434
        %v436 = vsel %vm430, %v435, %v434
        %vm437 = vcmp.lt.s32.totalorder %v405, 0
        %v438 = vsub.s32 0, %v405
        %v439 = vsel %vm437, %v438, %v405
        %v440 = vshrl.u32 %v439, 5
        %v441 = vand.u32 %v439, 31
        %v442 = vsub.s32 0, %v441
        %v443 = vsel %vm437, %v442, %v441
        %vm444 = vcmp.lt.s32.totalorder %v406, 0
        %v445 = vsub.s32 0, %v406
        %v446 = vsel %vm444, %v445, %v406
        %v447 = vshrl.u32 %v446, 5
        %v448 = vand.u32 %v446, 31
        %v449 = vsub.s32 0, %v448
        %v450 = vsel %vm444, %v449, %v448
        %vm451 = vcmp.lt.s32.totalorder %v407, 0
        %v452 = vsub.s32 0, %v407
        %v453 = vsel %vm451, %v452, %v407
        %v454 = vshrl.u32 %v453, 5
        %v455 = vand.u32 %v453, 31
        %v456 = vsub.s32 0, %v455
        %v457 = vsel %vm451, %v456, %v455
        %vm458 = vcmp.lt.s32.totalorder %v408, 0
        %v459 = vsub.s32 0, %v408
        %v460 = vsel %vm458, %v459, %v408
        %v461 = vshrl.u32 %v460, 5
        %v462 = vand.u32 %v460, 31
        %v463 = vsub.s32 0, %v462
        %v464 = vsel %vm458, %v463, %v462
        %vm465 = vcmp.ne.s32.totalorder %v415, 0
        %vm466 = vcmp.ne.s32.totalorder %v422, 0
        %vm467 = vcmp.ne.s32.totalorder %v429, 0
        %vm468 = vcmp.ne.s32.totalorder %v436, 0
        %vm469 = vcmp.ne.s32.totalorder %v443, 0
        %vm470 = vcmp.ne.s32.totalorder %v450, 0
        %vm471 = vcmp.ne.s32.totalorder %v457, 0
        %vm472 = vcmp.ne.s32.totalorder %v464, 0
        %vm473 = vcmp.lt.s32.totalorder %v415, 0
        %vm474 = vcmp.lt.s32.totalorder %v422, 0
        %vm475 = vcmp.lt.s32.totalorder %v429, 0
        %vm476 = vcmp.lt.s32.totalorder %v436, 0
        %vm477 = vcmp.lt.s32.totalorder %v443, 0
        %vm478 = vcmp.lt.s32.totalorder %v450, 0
        %vm479 = vcmp.lt.s32.totalorder %v457, 0
        %vm480 = vcmp.lt.s32.totalorder %v464, 0
        %vm481 = vmand %vm473, %vm465
        %vm482 = vmand %vm474, %vm466
        %vm483 = vmand %vm475, %vm467
        %vm484 = vmand %vm476, %vm468
        %vm485 = vmand %vm477, %vm469
        %vm486 = vmand %vm478, %vm470
        %vm487 = vmand %vm479, %vm471
        %vm488 = vmand %vm480, %vm472
        %v489 = vadd.s32 %v415, 32
        %v490 = vadd.s32 %v422, 32
        %v491 = vadd.s32 %v429, 32
        %v492 = vadd.s32 %v436, 32
        %v493 = vadd.s32 %v443, 32
        %v494 = vadd.s32 %v450, 32
        %v495 = vadd.s32 %v457, 32
        %v496 = vadd.s32 %v464, 32
        %v497 = vsel %vm481, %v489, %v415
        %v498 = vsel %vm482, %v490, %v422
        %v499 = vsel %vm483, %v491, %v429
        %v500 = vsel %vm484, %v492, %v436
        %v501 = vsel %vm485, %v493, %v443
        %v502 = vsel %vm486, %v494, %v450
        %v503 = vsel %vm487, %v495, %v457
        %v504 = vsel %vm488, %v496, %v464
        %v505 = vrot.slane %v391, 7
        %v506 = vrot.slane %v392, 7
        %v507 = vrot.slane %v393, 7
        %v508 = vrot.slane %v394, 7
        %v509 = vrot.slane %v395, 7
        %v510 = vrot.slane %v396, 7
        %v511 = vrot.slane %v397, 7
        %v512 = vrot.slane %v398, 7
        %vm513 = vcmp.lt.s32.totalorder %v401, 1
        %v514 = vsel %vm513, %v511, %v512
        %v515 = vsel %vm513, %v510, %v511
        %v516 = vsel %vm513, %v509, %v510
        %v517 = vsel %vm513, %v508, %v509
        %v518 = vsel %vm513, %v507, %v508
        %v519 = vsel %vm513, %v506, %v507
        %v520 = vsel %vm513, %v505, %v506
        %v521 = vsel %vm513, %v512, %v505
        %p522 = scmp.eq.s32.totalorder %s399, 1
        %vm523 = vcmp.ge.s32.totalorder %v497, 1
        %vm524 = vcmp.ge.s32.totalorder %v498, 1
        %vm525 = vcmp.ge.s32.totalorder %v499, 1
        %vm526 = vcmp.ge.s32.totalorder %v500, 1
        %vm527 = vcmp.ge.s32.totalorder %v501, 1
        %vm528 = vcmp.ge.s32.totalorder %v502, 1
        %vm529 = vcmp.ge.s32.totalorder %v503, 1
        %vm530 = vcmp.ge.s32.totalorder %v504, 1
        %s531 = scalar_select %p522, 1, 0
        %v532 = vstv %s531
        %vm533 = vcmp.eq.s32.totalorder %v532, 1
        %vm534 = vmand %vm533, %vm523
        %vm535 = vmand %vm533, %vm524
        %vm536 = vmand %vm533, %vm525
        %vm537 = vmand %vm533, %vm526
        %vm538 = vmand %vm533, %vm527
        %vm539 = vmand %vm533, %vm528
        %vm540 = vmand %vm533, %vm529
        %vm541 = vmand %vm533, %vm530
        %v542 = vsel %vm534, 1, 0
        %v543 = vsel %vm535, 1, 0
        %v544 = vsel %vm536, 1, 0
        %v545 = vsel %vm537, 1, 0
        %v546 = vsel %vm538, 1, 0
        %v547 = vsel %vm539, 1, 0
        %v548 = vsel %vm540, 1, 0
        %v549 = vsel %vm541, 1, 0
        %vm550 = vcmp.eq.s32.totalorder %v542, 1
        %vm551 = vcmp.eq.s32.totalorder %v543, 1
        %vm552 = vcmp.eq.s32.totalorder %v544, 1
        %vm553 = vcmp.eq.s32.totalorder %v545, 1
        %vm554 = vcmp.eq.s32.totalorder %v546, 1
        %vm555 = vcmp.eq.s32.totalorder %v547, 1
        %vm556 = vcmp.eq.s32.totalorder %v548, 1
        %vm557 = vcmp.eq.s32.totalorder %v549, 1
        %v558 = vsel %vm550, %v521, 0.0
        %v559 = vsel %vm551, %v520, 0.0
        %v560 = vsel %vm552, %v519, 0.0
        %v561 = vsel %vm553, %v518, 0.0
        %v562 = vsel %vm554, %v517, 0.0
        %v563 = vsel %vm555, %v516, 0.0
        %v564 = vsel %vm556, %v515, 0.0
        %v565 = vsel %vm557, %v514, 0.0
        %v566 = vrot.slane %v391, 6
        %v567 = vrot.slane %v392, 6
        %v568 = vrot.slane %v393, 6
        %v569 = vrot.slane %v394, 6
        %v570 = vrot.slane %v395, 6
        %v571 = vrot.slane %v396, 6
        %v572 = vrot.slane %v397, 6
        %v573 = vrot.slane %v398, 6
        %vm574 = vcmp.lt.s32.totalorder %v401, 2
        %v575 = vsel %vm574, %v572, %v573
        %v576 = vsel %vm574, %v571, %v572
        %v577 = vsel %vm574, %v570, %v571
        %v578 = vsel %vm574, %v569, %v570
        %v579 = vsel %vm574, %v568, %v569
        %v580 = vsel %vm574, %v567, %v568
        %v581 = vsel %vm574, %v566, %v567
        %v582 = vsel %vm574, %v573, %v566
        %p583 = scmp.eq.s32.totalorder %s399, 2
        %vm584 = vcmp.ge.s32.totalorder %v497, 2
        %vm585 = vcmp.ge.s32.totalorder %v498, 2
        %vm586 = vcmp.ge.s32.totalorder %v499, 2
        %vm587 = vcmp.ge.s32.totalorder %v500, 2
        %vm588 = vcmp.ge.s32.totalorder %v501, 2
        %vm589 = vcmp.ge.s32.totalorder %v502, 2
        %vm590 = vcmp.ge.s32.totalorder %v503, 2
        %vm591 = vcmp.ge.s32.totalorder %v504, 2
        %s592 = scalar_select %p583, 1, 0
        %v593 = vstv %s592
        %vm594 = vcmp.eq.s32.totalorder %v593, 1
        %vm595 = vmand %vm594, %vm584
        %vm596 = vmand %vm594, %vm585
        %vm597 = vmand %vm594, %vm586
        %vm598 = vmand %vm594, %vm587
        %vm599 = vmand %vm594, %vm588
        %vm600 = vmand %vm594, %vm589
        %vm601 = vmand %vm594, %vm590
        %vm602 = vmand %vm594, %vm591
        %v603 = vsel %vm595, 1, 0
        %v604 = vsel %vm596, 1, 0
        %v605 = vsel %vm597, 1, 0
        %v606 = vsel %vm598, 1, 0
        %v607 = vsel %vm599, 1, 0
        %v608 = vsel %vm600, 1, 0
        %v609 = vsel %vm601, 1, 0
        %v610 = vsel %vm602, 1, 0
        %vm611 = vcmp.eq.s32.totalorder %v603, 1
        %vm612 = vcmp.eq.s32.totalorder %v604, 1
        %vm613 = vcmp.eq.s32.totalorder %v605, 1
        %vm614 = vcmp.eq.s32.totalorder %v606, 1
        %vm615 = vcmp.eq.s32.totalorder %v607, 1
        %vm616 = vcmp.eq.s32.totalorder %v608, 1
        %vm617 = vcmp.eq.s32.totalorder %v609, 1
        %vm618 = vcmp.eq.s32.totalorder %v610, 1
        %v619 = vsel %vm611, %v582, %v558
        %v620 = vsel %vm612, %v581, %v559
        %v621 = vsel %vm613, %v580, %v560
        %v622 = vsel %vm614, %v579, %v561
        %v623 = vsel %vm615, %v578, %v562
        %v624 = vsel %vm616, %v577, %v563
        %v625 = vsel %vm617, %v576, %v564
        %v626 = vsel %vm618, %v575, %v565
        %v627 = vrot.slane %v391, 4
        %v628 = vrot.slane %v392, 4
        %v629 = vrot.slane %v393, 4
        %v630 = vrot.slane %v394, 4
        %v631 = vrot.slane %v395, 4
        %v632 = vrot.slane %v396, 4
        %v633 = vrot.slane %v397, 4
        %v634 = vrot.slane %v398, 4
        %vm635 = vcmp.lt.s32.totalorder %v401, 4
        %v636 = vsel %vm635, %v633, %v634
        %v637 = vsel %vm635, %v632, %v633
        %v638 = vsel %vm635, %v631, %v632
        %v639 = vsel %vm635, %v630, %v631
        %v640 = vsel %vm635, %v629, %v630
        %v641 = vsel %vm635, %v628, %v629
        %v642 = vsel %vm635, %v627, %v628
        %v643 = vsel %vm635, %v634, %v627
        %p644 = scmp.eq.s32.totalorder %s399, 4
        %vm645 = vcmp.ge.s32.totalorder %v497, 4
        %vm646 = vcmp.ge.s32.totalorder %v498, 4
        %vm647 = vcmp.ge.s32.totalorder %v499, 4
        %vm648 = vcmp.ge.s32.totalorder %v500, 4
        %vm649 = vcmp.ge.s32.totalorder %v501, 4
        %vm650 = vcmp.ge.s32.totalorder %v502, 4
        %vm651 = vcmp.ge.s32.totalorder %v503, 4
        %vm652 = vcmp.ge.s32.totalorder %v504, 4
        %s653 = scalar_select %p644, 1, 0
        %v654 = vstv %s653
        %vm655 = vcmp.eq.s32.totalorder %v654, 1
        %vm656 = vmand %vm655, %vm645
        %vm657 = vmand %vm655, %vm646
        %vm658 = vmand %vm655, %vm647
        %vm659 = vmand %vm655, %vm648
        %vm660 = vmand %vm655, %vm649
        %vm661 = vmand %vm655, %vm650
        %vm662 = vmand %vm655, %vm651
        %vm663 = vmand %vm655, %vm652
        %v664 = vsel %vm656, 1, 0
        %v665 = vsel %vm657, 1, 0
        %v666 = vsel %vm658, 1, 0
        %v667 = vsel %vm659, 1, 0
        %v668 = vsel %vm660, 1, 0
        %v669 = vsel %vm661, 1, 0
        %v670 = vsel %vm662, 1, 0
        %v671 = vsel %vm663, 1, 0
        %vm672 = vcmp.eq.s32.totalorder %v664, 1
        %vm673 = vcmp.eq.s32.totalorder %v665, 1
        %vm674 = vcmp.eq.s32.totalorder %v666, 1
        %vm675 = vcmp.eq.s32.totalorder %v667, 1
        %vm676 = vcmp.eq.s32.totalorder %v668, 1
        %vm677 = vcmp.eq.s32.totalorder %v669, 1
        %vm678 = vcmp.eq.s32.totalorder %v670, 1
        %vm679 = vcmp.eq.s32.totalorder %v671, 1
        %v680 = vsel %vm672, %v643, %v619
        %v681 = vsel %vm673, %v642, %v620
        %v682 = vsel %vm674, %v641, %v621
        %v683 = vsel %vm675, %v640, %v622
        %v684 = vsel %vm676, %v639, %v623
        %v685 = vsel %vm677, %v638, %v624
        %v686 = vsel %vm678, %v637, %v625
        %v687 = vsel %vm679, %v636, %v626
        %v688 = vpack.c.bf16 %v392, %v391
        %v689 = vpack.c.bf16 %v681, %v680
        %v690 = vpack.c.bf16 %v394, %v393
        %v691 = vpack.c.bf16 %v683, %v682
        %v692 = vpack.c.bf16 %v396, %v395
        %v693 = vpack.c.bf16 %v685, %v684
        %v694 = vpack.c.bf16 %v398, %v397
        %v695 = vpack.c.bf16 %v687, %v686
        %v696 = vld [vmem:[%s310] sm:$0xff]
        %v697 = vld [vmem:[%s310 + $0x8] sm:$0xff]
        %v698 = vld [vmem:[%s310 + $0x10] sm:$0xff]
        %v699 = vld [vmem:[%s310 + $0x18] sm:$0xff]
        %v700 = vld [vmem:[%s310 + $0x20] sm:$0xff]
        %v701 = vld [vmem:[%s310 + $0x28] sm:$0xff]
        %v702 = vld [vmem:[%s310 + $0x30] sm:$0xff]
        %v703 = vld [vmem:[%s310 + $0x38] sm:$0xff]
        %v704 = vld [vmem:[%s310 + $0x40] sm:$0xff]
        %v705 = vld [vmem:[%s310 + $0x48] sm:$0xff]
        %v706 = vld [vmem:[%s310 + $0x50] sm:$0xff]
        %v707 = vld [vmem:[%s310 + $0x58] sm:$0xff]
        %v708 = vld [vmem:[%s310 + $0x60] sm:$0xff]
        %v709 = vld [vmem:[%s310 + $0x68] sm:$0xff]
        %v710 = vld [vmem:[%s310 + $0x70] sm:$0xff]
        %v711 = vld [vmem:[%s310 + $0x78] sm:$0xff]
        %v712 = vld [vmem:[%s310 + $0x80] sm:$0xff]
        %v713 = vld [vmem:[%s310 + $0x88] sm:$0xff]
        %v714 = vld [vmem:[%s310 + $0x90] sm:$0xff]
        %v715 = vld [vmem:[%s310 + $0x98] sm:$0xff]
        %v716 = vld [vmem:[%s310 + $0xa0] sm:$0xff]
        %v717 = vld [vmem:[%s310 + $0xa8] sm:$0xff]
        %v718 = vld [vmem:[%s310 + $0xb0] sm:$0xff]
        %v719 = vld [vmem:[%s310 + $0xb8] sm:$0xff]
        %v720 = vld [vmem:[%s310 + $0xc0] sm:$0xff]
        %v721 = vld [vmem:[%s310 + $0xc8] sm:$0xff]
        %v722 = vld [vmem:[%s310 + $0xd0] sm:$0xff]
        %v723 = vld [vmem:[%s310 + $0xd8] sm:$0xff]
        %v724 = vld [vmem:[%s310 + $0xe0] sm:$0xff]
        %v725 = vld [vmem:[%s310 + $0xe8] sm:$0xff]
        %v726 = vld [vmem:[%s310 + $0xf0] sm:$0xff]
        %v727 = vld [vmem:[%s310 + $0xf8] sm:$0xff]
        %v728 = vld [vmem:[%s319] sm:$0x3]
        %v730 = vlaneseq
        %v731 = vshrl.u32 %v730, 7
        %v732 = vsub.s32 0, %v731
        %v733 = vrot.slane %v728, %v732
        %v734 = vlaneseq
        %v735 = vshrl.u32 %v734, 7
        %v736 = vsub.s32 1, %v735
        %v737 = vrot.slane %v728, %v736
        %v772 = vunpack.c.l.b16 %v696
        %v773 = vunpack.c.h.b16 %v696
        %v774 = vunpack.c.l.b16 %v697
        %v775 = vunpack.c.h.b16 %v697
        %v776 = vunpack.c.l.b16 %v698
        %v777 = vunpack.c.h.b16 %v698
        %v778 = vunpack.c.l.b16 %v699
        %v779 = vunpack.c.h.b16 %v699
        %v780 = vunpack.c.l.b16 %v700
        %v781 = vunpack.c.h.b16 %v700
        %v782 = vunpack.c.l.b16 %v701
        %v783 = vunpack.c.h.b16 %v701
        %v784 = vunpack.c.l.b16 %v702
        %v785 = vunpack.c.h.b16 %v702
        %v786 = vunpack.c.l.b16 %v703
        %v787 = vunpack.c.h.b16 %v703
        %v788 = vunpack.c.l.b16 %v704
        %v789 = vunpack.c.h.b16 %v704
        %v790 = vunpack.c.l.b16 %v705
        %v791 = vunpack.c.h.b16 %v705
        %v792 = vunpack.c.l.b16 %v706
        %v793 = vunpack.c.h.b16 %v706
        %v794 = vunpack.c.l.b16 %v707
        %v795 = vunpack.c.h.b16 %v707
        %v796 = vunpack.c.l.b16 %v708
        %v797 = vunpack.c.h.b16 %v708
        %v798 = vunpack.c.l.b16 %v709
        %v799 = vunpack.c.h.b16 %v709
        %v800 = vunpack.c.l.b16 %v710
        %v801 = vunpack.c.h.b16 %v710
        %v802 = vunpack.c.l.b16 %v711
        %v803 = vunpack.c.h.b16 %v711
        %v804 = vunpack.c.l.b16 %v712
        %v805 = vunpack.c.h.b16 %v712
        %v806 = vunpack.c.l.b16 %v713
        %v807 = vunpack.c.h.b16 %v713
        %v808 = vunpack.c.l.b16 %v714
        %v809 = vunpack.c.h.b16 %v714
        %v810 = vunpack.c.l.b16 %v715
        %v811 = vunpack.c.h.b16 %v715
        %v812 = vunpack.c.l.b16 %v716
        %v813 = vunpack.c.h.b16 %v716
        %v814 = vunpack.c.l.b16 %v717
        %v815 = vunpack.c.h.b16 %v717
        %v816 = vunpack.c.l.b16 %v718
        %v817 = vunpack.c.h.b16 %v718
        %v818 = vunpack.c.l.b16 %v719
        %v819 = vunpack.c.h.b16 %v719
        %v820 = vunpack.c.l.b16 %v720
        %v821 = vunpack.c.h.b16 %v720
        %v822 = vunpack.c.l.b16 %v721
        %v823 = vunpack.c.h.b16 %v721
        %v824 = vunpack.c.l.b16 %v722
        %v825 = vunpack.c.h.b16 %v722
        %v826 = vunpack.c.l.b16 %v723
        %v827 = vunpack.c.h.b16 %v723
        %v828 = vunpack.c.l.b16 %v724
        %v829 = vunpack.c.h.b16 %v724
        %v830 = vunpack.c.l.b16 %v725
        %v831 = vunpack.c.h.b16 %v725
        %v832 = vunpack.c.l.b16 %v726
        %v833 = vunpack.c.h.b16 %v726
        %v834 = vunpack.c.l.b16 %v727
        %v835 = vunpack.c.h.b16 %v727
        %v836 = vpack.c.b16 %v774, %v772
        %v837 = vpack.c.b16 %v775, %v773
        %v838 = vpack.c.b16 %v778, %v776
        %v839 = vpack.c.b16 %v779, %v777
        %v840 = vpack.c.b16 %v782, %v780
        %v841 = vpack.c.b16 %v783, %v781
        %v842 = vpack.c.b16 %v786, %v784
        %v843 = vpack.c.b16 %v787, %v785
        %v844 = vpack.c.b16 %v790, %v788
        %v845 = vpack.c.b16 %v791, %v789
        %v846 = vpack.c.b16 %v794, %v792
        %v847 = vpack.c.b16 %v795, %v793
        %v848 = vpack.c.b16 %v798, %v796
        %v849 = vpack.c.b16 %v799, %v797
        %v850 = vpack.c.b16 %v802, %v800
        %v851 = vpack.c.b16 %v803, %v801
        %v852 = vpack.c.b16 %v806, %v804
        %v853 = vpack.c.b16 %v807, %v805
        %v854 = vpack.c.b16 %v810, %v808
        %v855 = vpack.c.b16 %v811, %v809
        %v856 = vpack.c.b16 %v814, %v812
        %v857 = vpack.c.b16 %v815, %v813
        %v858 = vpack.c.b16 %v818, %v816
        %v859 = vpack.c.b16 %v819, %v817
        %v860 = vpack.c.b16 %v822, %v820
        %v861 = vpack.c.b16 %v823, %v821
        %v862 = vpack.c.b16 %v826, %v824
        %v863 = vpack.c.b16 %v827, %v825
        %v864 = vpack.c.b16 %v830, %v828
        %v865 = vpack.c.b16 %v831, %v829
        %v866 = vpack.c.b16 %v834, %v832
        %v867 = vpack.c.b16 %v835, %v833
        %900 = vmatprep.subr.bf16.mxu0 %v837
        %901 = vmatpush1.bf16.msra.mxu0 %v836
        %902 = vmatprep.subr.bf16.mxu0 %v839
        %903 = vmatpush1.bf16.msra.mxu0 %v838
        %904 = vmatprep.subr.bf16.mxu0 %v841
        %905 = vmatpush1.bf16.msra.mxu0 %v840
        %906 = vmatprep.subr.bf16.mxu0 %v843
        %907 = vmatpush1.bf16.msra.mxu0 %v842
        %908 = vmatprep.subr.bf16.mxu0 %v845
        %909 = vmatpush1.bf16.msra.mxu0 %v844
        %910 = vmatprep.subr.bf16.mxu0 %v847
        %911 = vmatpush1.bf16.msra.mxu0 %v846
        %912 = vmatprep.subr.bf16.mxu0 %v849
        %913 = vmatpush1.bf16.msra.mxu0 %v848
        %914 = vmatprep.subr.bf16.mxu0 %v851
        %915 = vmatpush1.bf16.msra.mxu0 %v850
        %916 = vmatprep.subr.bf16.mxu0 %v853
        %917 = vmatpush1.bf16.msra.mxu0 %v852
        %918 = vmatprep.subr.bf16.mxu0 %v855
        %919 = vmatpush1.bf16.msra.mxu0 %v854
        %920 = vmatprep.subr.bf16.mxu0 %v857
        %921 = vmatpush1.bf16.msra.mxu0 %v856
        %922 = vmatprep.subr.bf16.mxu0 %v859
        %923 = vmatpush1.bf16.msra.mxu0 %v858
        %924 = vmatprep.subr.bf16.mxu0 %v861
        %925 = vmatpush1.bf16.msra.mxu0 %v860
        %926 = vmatprep.subr.bf16.mxu0 %v863
        %927 = vmatpush1.bf16.msra.mxu0 %v862
        %928 = vmatprep.subr.bf16.mxu0 %v865
        %929 = vmatpush1.bf16.msra.mxu0 %v864
        %930 = vmatprep.subr.bf16.mxu0 %v867
        %931 = vmatpush1.bf16.msra.mxu0 %v866
        %932 = vmatprep.mubr.bf16.mxu0 %v689
        %933 = vmatmul.mubr.bf16.gmra.mrb[0].mxu0 %v688
        %v934 = vpop.f32.mrb[0].mxu0
        %v935 = vadd.f32 %v733, %v934
        %v936 = vpop.f32.mrb[0].mxu0
        %v937 = vadd.f32 %v737, %v936
        %v938 = vpop.f32.mrb[0].mxu0
        %v939 = vadd.f32 %v733, %v938
        %v940 = vpop.f32.mrb[0].mxu0
        %v941 = vadd.f32 %v737, %v940
        %942 = vmatprep.mubr.bf16.mxu0 %v691
        %943 = vmatmul.mubr.bf16.gmra.mrb[0].mxu0 %v690
        %v944 = vpop.f32.mrb[0].mxu0
        %v945 = vadd.f32 %v733, %v944
        %v946 = vpop.f32.mrb[0].mxu0
        %v947 = vadd.f32 %v737, %v946
        %v948 = vpop.f32.mrb[0].mxu0
        %v949 = vadd.f32 %v733, %v948
        %v950 = vpop.f32.mrb[0].mxu0
        %v951 = vadd.f32 %v737, %v950
        %952 = vmatprep.mubr.bf16.mxu0 %v693
        %953 = vmatmul.mubr.bf16.gmra.mrb[0].mxu0 %v692
        %v954 = vpop.f32.mrb[0].mxu0
        %v955 = vadd.f32 %v733, %v954
        %v956 = vpop.f32.mrb[0].mxu0
        %v957 = vadd.f32 %v737, %v956
        %v958 = vpop.f32.mrb[0].mxu0
        %v959 = vadd.f32 %v733, %v958
        %v960 = vpop.f32.mrb[0].mxu0
        %v961 = vadd.f32 %v737, %v960
        %962 = vmatprep.mubr.bf16.mxu0 %v695
        %963 = vmatmul.mubr.bf16.gmra.mrb[0].mxu0 %v694
        %v964 = vpop.f32.mrb[0].mxu0
        %v965 = vadd.f32 %v733, %v964
        %v966 = vpop.f32.mrb[0].mxu0
        %v967 = vadd.f32 %v737, %v966
        %v968 = vpop.f32.mrb[0].mxu0
        %v969 = vadd.f32 %v733, %v968
        %v970 = vpop.f32.mrb[0].mxu0
        %v971 = vadd.f32 %v737, %v970
        %972 = vdwg.mxu0
        %v973 = vtanh.pop %v935
        %v974 = vtanh.pop %v939
        %v975 = vtanh.pop %v945
        %v976 = vtanh.pop %v949
        %v977 = vtanh.pop %v955
        %v978 = vtanh.pop %v959
        %v979 = vtanh.pop %v965
        %v980 = vtanh.pop %v969
        %v981 = vxor.u32 %v937, 2147483648
        %v982 = vxor.u32 %v941, 2147483648
        %v983 = vxor.u32 %v947, 2147483648
        %v984 = vxor.u32 %v951, 2147483648
        %v985 = vxor.u32 %v957, 2147483648
        %v986 = vxor.u32 %v961, 2147483648
        %v987 = vxor.u32 %v967, 2147483648
        %v988 = vxor.u32 %v971, 2147483648
        %v989 = vmul.f32 %v981, 1.442695
        %v990 = vpow.pop %v989
        %v991 = vmul.f32 %v982, 1.442695
        %v992 = vpow.pop %v991
        %v993 = vmul.f32 %v983, 1.442695
        %v994 = vpow.pop %v993
        %v995 = vmul.f32 %v984, 1.442695
        %v996 = vpow.pop %v995
        %v997 = vmul.f32 %v985, 1.442695
        %v998 = vpow.pop %v997
        %v999 = vmul.f32 %v986, 1.442695
        %v1000 = vpow.pop %v999
        %v1001 = vmul.f32 %v987, 1.442695
        %v1002 = vpow.pop %v1001
        %v1003 = vmul.f32 %v988, 1.442695
        %v1004 = vpow.pop %v1003
        %v1005 = vadd.f32 %v990, 1.0
        %v1006 = vadd.f32 %v992, 1.0
        %v1007 = vadd.f32 %v994, 1.0
        %v1008 = vadd.f32 %v996, 1.0
        %v1009 = vadd.f32 %v998, 1.0
        %v1010 = vadd.f32 %v1000, 1.0
        %v1011 = vadd.f32 %v1002, 1.0
        %v1012 = vadd.f32 %v1004, 1.0
        %v1013 = vrcp.pop %v1005
        %v1014 = vmul.f32 1.0, %v1013
        %v1015 = vrcp.pop %v1006
        %v1016 = vmul.f32 1.0, %v1015
        %v1017 = vrcp.pop %v1007
        %v1018 = vmul.f32 1.0, %v1017
        %v1019 = vrcp.pop %v1008
        %v1020 = vmul.f32 1.0, %v1019
        %v1021 = vrcp.pop %v1009
        %v1022 = vmul.f32 1.0, %v1021
        %v1023 = vrcp.pop %v1010
        %v1024 = vmul.f32 1.0, %v1023
        %v1025 = vrcp.pop %v1011
        %v1026 = vmul.f32 1.0, %v1025
        %v1027 = vrcp.pop %v1012
        %v1028 = vmul.f32 1.0, %v1027
        %v1029 = vmul.f32 %v973, %v1014
        %v1030 = vmul.f32 %v974, %v1016
        %v1031 = vmul.f32 %v975, %v1018
        %v1032 = vmul.f32 %v976, %v1020
        %v1033 = vmul.f32 %v977, %v1022
        %v1034 = vmul.f32 %v978, %v1024
        %v1035 = vmul.f32 %v979, %v1026
        %v1036 = vmul.f32 %v980, %v1028
        %v1037 = vpack.c.bf16 %v1030, %v1029
        %v1038 = vpack.c.bf16 %v1032, %v1031
        %v1039 = vpack.c.bf16 %v1034, %v1033
        %v1040 = vpack.c.bf16 %v1036, %v1035
        %v1041 = vld [vmem:[%s328] sm:$0xff]
        %v1042 = vld [vmem:[%s328 + $0x8] sm:$0xff]
        %v1043 = vld [vmem:[%s328 + $0x10] sm:$0xff]
        %v1044 = vld [vmem:[%s328 + $0x18] sm:$0xff]
        %v1045 = vld [vmem:[%s328 + $0x20] sm:$0xff]
        %v1046 = vld [vmem:[%s328 + $0x28] sm:$0xff]
        %v1047 = vld [vmem:[%s328 + $0x30] sm:$0xff]
        %v1048 = vld [vmem:[%s328 + $0x38] sm:$0xff]
        %v1049 = vld [vmem:[%s328 + $0x40] sm:$0xff]
        %v1050 = vld [vmem:[%s328 + $0x48] sm:$0xff]
        %v1051 = vld [vmem:[%s328 + $0x50] sm:$0xff]
        %v1052 = vld [vmem:[%s328 + $0x58] sm:$0xff]
        %v1053 = vld [vmem:[%s328 + $0x60] sm:$0xff]
        %v1054 = vld [vmem:[%s328 + $0x68] sm:$0xff]
        %v1055 = vld [vmem:[%s328 + $0x70] sm:$0xff]
        %v1056 = vld [vmem:[%s328 + $0x78] sm:$0xff]
        %v1057 = vld [vmem:[%s368] sm:$0x3]
        %v1059 = vlaneseq
        %v1060 = vshrl.u32 %v1059, 7
        %v1061 = vsub.s32 0, %v1060
        %v1062 = vrot.slane %v1057, %v1061
        %v1063 = vlaneseq
        %v1064 = vshrl.u32 %v1063, 7
        %v1065 = vsub.s32 1, %v1064
        %v1066 = vrot.slane %v1057, %v1065
        %v1085 = vunpack.c.l.b16 %v1041
        %v1086 = vunpack.c.h.b16 %v1041
        %v1087 = vunpack.c.l.b16 %v1042
        %v1088 = vunpack.c.h.b16 %v1042
        %v1089 = vunpack.c.l.b16 %v1043
        %v1090 = vunpack.c.h.b16 %v1043
        %v1091 = vunpack.c.l.b16 %v1044
        %v1092 = vunpack.c.h.b16 %v1044
        %v1093 = vunpack.c.l.b16 %v1045
        %v1094 = vunpack.c.h.b16 %v1045
        %v1095 = vunpack.c.l.b16 %v1046
        %v1096 = vunpack.c.h.b16 %v1046
        %v1097 = vunpack.c.l.b16 %v1047
        %v1098 = vunpack.c.h.b16 %v1047
        %v1099 = vunpack.c.l.b16 %v1048
        %v1100 = vunpack.c.h.b16 %v1048
        %v1101 = vunpack.c.l.b16 %v1049
        %v1102 = vunpack.c.h.b16 %v1049
        %v1103 = vunpack.c.l.b16 %v1050
        %v1104 = vunpack.c.h.b16 %v1050
        %v1105 = vunpack.c.l.b16 %v1051
        %v1106 = vunpack.c.h.b16 %v1051
        %v1107 = vunpack.c.l.b16 %v1052
        %v1108 = vunpack.c.h.b16 %v1052
        %v1109 = vunpack.c.l.b16 %v1053
        %v1110 = vunpack.c.h.b16 %v1053
        %v1111 = vunpack.c.l.b16 %v1054
        %v1112 = vunpack.c.h.b16 %v1054
        %v1113 = vunpack.c.l.b16 %v1055
        %v1114 = vunpack.c.h.b16 %v1055
        %v1115 = vunpack.c.l.b16 %v1056
        %v1116 = vunpack.c.h.b16 %v1056
        %v1117 = vpack.c.b16 %v1087, %v1085
        %v1118 = vpack.c.b16 %v1088, %v1086
        %v1119 = vpack.c.b16 %v1091, %v1089
        %v1120 = vpack.c.b16 %v1092, %v1090
        %v1121 = vpack.c.b16 %v1095, %v1093
        %v1122 = vpack.c.b16 %v1096, %v1094
        %v1123 = vpack.c.b16 %v1099, %v1097
        %v1124 = vpack.c.b16 %v1100, %v1098
        %v1125 = vpack.c.b16 %v1103, %v1101
        %v1126 = vpack.c.b16 %v1104, %v1102
        %v1127 = vpack.c.b16 %v1107, %v1105
        %v1128 = vpack.c.b16 %v1108, %v1106
        %v1129 = vpack.c.b16 %v1111, %v1109
        %v1130 = vpack.c.b16 %v1112, %v1110
        %v1131 = vpack.c.b16 %v1115, %v1113
        %v1132 = vpack.c.b16 %v1116, %v1114
        %1149 = vmatprep.subr.bf16.mxu0 %v1118
        %1150 = vmatpush1.bf16.msra.mxu0 %v1117
        %1151 = vmatprep.subr.bf16.mxu0 %v1120
        %1152 = vmatpush1.bf16.msra.mxu0 %v1119
        %1153 = vmatprep.subr.bf16.mxu0 %v1122
        %1154 = vmatpush1.bf16.msra.mxu0 %v1121
        %1155 = vmatprep.subr.bf16.mxu0 %v1124
        %1156 = vmatpush1.bf16.msra.mxu0 %v1123
        %1157 = vmatprep.subr.bf16.mxu0 %v1126
        %1158 = vmatpush1.bf16.msra.mxu0 %v1125
        %1159 = vmatprep.subr.bf16.mxu0 %v1128
        %1160 = vmatpush1.bf16.msra.mxu0 %v1127
        %1161 = vmatprep.subr.bf16.mxu0 %v1130
        %1162 = vmatpush1.bf16.msra.mxu0 %v1129
        %1163 = vmatprep.subr.bf16.mxu0 %v1132
        %1164 = vmatpush1.bf16.msra.mxu0 %v1131
        %1165 = vmatprep.subr.bf16.mxu0 0
        %1166 = vmatpush1.bf16.msra.mxu0 0
        %1167 = vmatprep.subr.bf16.mxu0 0
        %1168 = vmatpush1.bf16.msra.mxu0 0
        %1169 = vmatprep.subr.bf16.mxu0 0
        %1170 = vmatpush1.bf16.msra.mxu0 0
        %1171 = vmatprep.subr.bf16.mxu0 0
        %1172 = vmatpush1.bf16.msra.mxu0 0
        %1173 = vmatprep.subr.bf16.mxu0 0
        %1174 = vmatpush1.bf16.msra.mxu0 0
        %1175 = vmatprep.subr.bf16.mxu0 0
        %1176 = vmatpush1.bf16.msra.mxu0 0
        %1177 = vmatprep.subr.bf16.mxu0 0
        %1178 = vmatpush1.bf16.msra.mxu0 0
        %1179 = vmatprep.subr.bf16.mxu0 0
        %1180 = vmatpush1.bf16.msra.mxu0 0
        %1181 = vmatprep.mubr.bf16.mxu0 0
        %1182 = vmatmul.mubr.bf16.gmra.mrb[0].mxu0 %v1037
        %v1183 = vpop.f32.mrb[0].mxu0
        %v1184 = vadd.f32 %v1062, %v1183
        %v1185 = vpop.f32.mrb[0].mxu0
        %v1186 = vadd.f32 %v1066, %v1185
        %v1187 = vpop.f32.mrb[0].mxu0
        %v1188 = vadd.f32 %v1062, %v1187
        %v1189 = vpop.f32.mrb[0].mxu0
        %v1190 = vadd.f32 %v1066, %v1189
        %1191 = vmatprep.mubr.bf16.mxu0 0
        %1192 = vmatmul.mubr.bf16.gmra.mrb[0].mxu0 %v1038
        %v1193 = vpop.f32.mrb[0].mxu0
        %v1194 = vadd.f32 %v1062, %v1193
        %v1195 = vpop.f32.mrb[0].mxu0
        %v1196 = vadd.f32 %v1066, %v1195
        %v1197 = vpop.f32.mrb[0].mxu0
        %v1198 = vadd.f32 %v1062, %v1197
        %v1199 = vpop.f32.mrb[0].mxu0
        %v1200 = vadd.f32 %v1066, %v1199
        %1201 = vmatprep.mubr.bf16.mxu0 0
        %1202 = vmatmul.mubr.bf16.gmra.mrb[0].mxu0 %v1039
        %v1203 = vpop.f32.mrb[0].mxu0
        %v1204 = vadd.f32 %v1062, %v1203
        %v1205 = vpop.f32.mrb[0].mxu0
        %v1206 = vadd.f32 %v1066, %v1205
        %v1207 = vpop.f32.mrb[0].mxu0
        %v1208 = vadd.f32 %v1062, %v1207
        %v1209 = vpop.f32.mrb[0].mxu0
        %v1210 = vadd.f32 %v1066, %v1209
        %1211 = vmatprep.mubr.bf16.mxu0 0
        %1212 = vmatmul.mubr.bf16.gmra.mrb[0].mxu0 %v1040
        %v1213 = vpop.f32.mrb[0].mxu0
        %v1214 = vadd.f32 %v1062, %v1213
        %v1215 = vpop.f32.mrb[0].mxu0
        %v1216 = vadd.f32 %v1066, %v1215
        %v1217 = vpop.f32.mrb[0].mxu0
        %v1218 = vadd.f32 %v1062, %v1217
        %v1219 = vpop.f32.mrb[0].mxu0
        %v1220 = vadd.f32 %v1066, %v1219
        %1221 = vdwg.mxu0
        %v1222 = vadd.f32 %v391, %v1184
        %v1223 = vadd.f32 %v392, %v1188
        %v1224 = vadd.f32 %v393, %v1194
        %v1225 = vadd.f32 %v394, %v1198
        %v1226 = vadd.f32 %v395, %v1204
        %v1227 = vadd.f32 %v396, %v1208
        %v1228 = vadd.f32 %v397, %v1214
        %v1229 = vadd.f32 %v398, %v1218
        %1230 = vst [vmem:[#allocation2] sm:$0xff] %v1222
        %1231 = vst [vmem:[#allocation2 + $0x8] sm:$0xff] %v1223
        %1232 = vst [vmem:[#allocation2 + $0x10] sm:$0xff] %v1224
        %1233 = vst [vmem:[#allocation2 + $0x18] sm:$0xff] %v1225
        %1234 = vst [vmem:[#allocation2 + $0x20] sm:$0xff] %v1226
        %1235 = vst [vmem:[#allocation2 + $0x28] sm:$0xff] %v1227
        %1236 = vst [vmem:[#allocation2 + $0x30] sm:$0xff] %v1228
        %1237 = vst [vmem:[#allocation2 + $0x38] sm:$0xff] %v1229
        %v1238 = vadd.f32 %v1186, %v1190
        %v1239 = vadd.f32 %v1238, %v1196
        %v1240 = vadd.f32 %v1239, %v1200
        %v1241 = vrot.slane %v1240, 4
        %v1242 = vadd.f32 %v1240, %v1241
        %v1243 = vrot.slane %v1242, 2
        %v1244 = vadd.f32 %v1242, %v1243
        %v1245 = vrot.slane %v1244, 1
        %v1246 = vadd.f32 %v1244, %v1245
        %v1247 = vadd.f32 %v1206, %v1210
        %v1248 = vadd.f32 %v1247, %v1216
        %v1249 = vadd.f32 %v1248, %v1220
        %v1250 = vrot.slane %v1249, 4
        %v1251 = vadd.f32 %v1249, %v1250
        %v1252 = vrot.slane %v1251, 2
        %v1253 = vadd.f32 %v1251, %v1252
        %v1254 = vrot.slane %v1253, 1
        %v1255 = vadd.f32 %v1253, %v1254
        %v1256 = vld [vmem:[#allocation13] sm:$0x3]
        %v1257 = vmul.f32 %v1246, 0.03125
        %v1258 = vmul.f32 %v1255, 0.03125
        %vm1261 = vcmask 1041409
        %v1262 = vsel %vm1261, %v1258, %v1257
        %v1264 = vadd.f32 %v1256, %v1262
        %1265 = vst [vmem:[#allocation13] sm:$0x3] %v1264
        // Predicated region
        $region61: #{tpu_custom_call.1} parent=39 // pred_check
          %p1266 = pneg %p189
        $region62: #{tpu_custom_call.1} parent=39 // pred_check_branch
          %1268 = sbr.rel (%p1266) target = $region64
        $region63: #{tpu_custom_call.1} parent=39 // pred_region
          %s1270 = ssub.s32 32, 32
          %1271 = vsyncadd [#allocation7], %s1270
          %s1272 = smul.addr %s33, 32
          %s1273 = scalar_lea.hbm %s6, %s1272
          %s1275 = sshll.u32 [#allocation13], 4
          %s1276 = int_to_ptr.vmem [resolvable:$true] %s1275
          %1278 = dma.vmem_to_hbm [thread:$0]  %s1276, 32, %s1273, [#allocation7]
        $region64: #{tpu_custom_call.1} parent=39 // pred_fallthru
          _
        // Predicated region
        $region65: #{tpu_custom_call.1} parent=39 // pred_check
          %p1279 = pneg %p189
        $region66: #{tpu_custom_call.1} parent=39 // pred_check_branch
          %1281 = sbr.rel (%p1279) target = $region68
        $region67: #{tpu_custom_call.1} parent=39 // pred_region
          %1282 = dma.done [#allocation7], 32
        $region68: #{tpu_custom_call.1} parent=39 // pred_fallthru
          _
      $region40: #{tpu_custom_call.1} parent=5 // pred_fallthru
        _
      %p1283 = scmp.le.s32.totalorder 2, %s24
      // Predicated region
      $region69: #{tpu_custom_call.1} parent=5 // pred_check
        %p1284 = pneg %p1283
      $region70: #{tpu_custom_call.1} parent=5 // pred_check_branch
        %1286 = sbr.rel (%p1284) target = $region72
      $region71: #{tpu_custom_call.1} parent=5 // pred_region
        %s1287 = ssub.s32 %s24, 2
      $region72: #{tpu_custom_call.1} parent=5 // pred_fallthru
        _
    $region6: #{tpu_custom_call.1} parent=1 // loop_footer
      %s28 = sadd.s32 1, %s24
    $region7: #{tpu_custom_call.1} parent=1 // loop_footer_branch
      %23 = sbr.rel target = $region3
    $region8: #{tpu_custom_call.1} parent=1 // loop_exit
      _
    %1288 = vsyncpa [#allocation6], 1
    %s1289 = scalar_lea.sflag [#allocation6], 1
    %1290 = vsyncpa %s1289, 1
    %1291 = vsyncpa [#allocation9], 1
    %s1292 = scalar_lea.sflag [#allocation9], 1
    %1293 = vsyncpa %s1292, 1
    %1294 = vsyncpa [#allocation12], 1
    %s1295 = scalar_lea.sflag [#allocation12], 1
    %1296 = vsyncpa %s1295, 1
    %1297 = vsyncpa [#allocation7], 1
    %s1298 = scalar_lea.sflag [#allocation7], 1
    %1299 = vsyncpa %s1298, 1

</llo_original>
